<compile_context>
chip_gen: v7x
topology: tpu7x:2x2x1
jax: 0.10.0
libtpu: 0.0.40
codegen_flags: <defaults>
</compile_context>

<pallas_src>
import numpy as np
import jax
import jax.numpy as jnp
from jax import lax
from jax.experimental import pallas as pl
from jax.experimental.pallas import tpu as pltpu

_VMEM = pl.BlockSpec(memory_space=pltpu.MemorySpace.VMEM)
_HIGHEST = jax.lax.Precision.HIGHEST


# --------------------- host-side (numpy) operator folding, done once ---------------------

def _interp_matrix(out_size, in_size):
    # bilinear, align_corners=True, as (out_size, in_size) matrix
    A = np.zeros((out_size, in_size), np.float32)
    for i in range(out_size):
        src = 0.0 if out_size == 1 else i * (in_size - 1) / (out_size - 1)
        i0 = min(max(int(np.floor(src)), 0), in_size - 1)
        i1 = min(i0 + 1, in_size - 1)
        f = src - i0
        A[i, i0] += 1.0 - f
        A[i, i1] += f
    return A


def _interp_kron(in_hw, out_hw):
    A = _interp_matrix(out_hw[0], in_hw[0])
    B = _interp_matrix(out_hw[1], in_hw[1])
    return np.kron(A, B).T.astype(np.float32)      # (h_in*w_in, h_out*w_out)


def _conv_operator(wt, scale, bias, stride, pad, H, W):
    """Fold a KxK/stride conv + BN scale into a dense (Cin*H*W, Cout*Ho*Wo) operator
    on per-image channel-major flattened activations, plus a (1, Cout*Ho*Wo) bias row."""
    wt = np.asarray(wt, np.float32)
    scale = np.asarray(scale, np.float32)
    bias = np.asarray(bias, np.float32)
    Cout, Cin, K, _ = wt.shape
    Ho = (H + 2 * pad - K) // stride + 1
    Wo = (W + 2 * pad - K) // stride + 1
    geo = np.zeros((K, K, H * W, Ho * Wo), np.float32)
    for ky in range(K):
        for kx in range(K):
            for oy in range(Ho):
                yi = stride * oy + ky - pad
                if yi < 0 or yi >= H:
                    continue
                for ox in range(Wo):
                    xi = stride * ox + kx - pad
                    if xi < 0 or xi >= W:
                        continue
                    geo[ky, kx, yi * W + xi, oy * Wo + ox] = 1.0
    ws = wt * scale[:, None, None, None]                               # conv weights * BN scale
    M = np.einsum('ocij,ijst->csot', ws, geo).reshape(Cin * H * W, Cout * Ho * Wo)
    bvec = np.repeat(bias, Ho * Wo)[None, :]
    return M.astype(np.float32), bvec.astype(np.float32), Ho, Wo


# ------------------------------ fused APNModule forward ------------------------------

def make_apn_forward(params, x_shape):
    """Fold all operators once, return a jitted forward(x) -> (N, nclass, H, W)."""
    N, Cin, H, W = x_shape
    ncls = params['level1_w'].shape[0]
    R = N * ncls                                    # class-stacked rows, r = n*ncls + o

    # folded strided-conv operators (conv + BN scale/bias; ReLU applied in kernel)
    M1np, b1np, H1, W1 = _conv_operator(params['conv1_w'], params['conv1_s'],
                                        params['conv1_b'], 2, 1, H, W)
    M2np, b2np, H2, W2 = _conv_operator(params['conv2_w'], params['conv2_s'],
                                        params['conv2_b'], 2, 2, H1, W1)
    M3np, b3np, H3, W3 = _conv_operator(params['conv3_w'], params['conv3_s'],
                                        params['conv3_b'], 2, 3, H2, W2)

    # bilinear (align_corners=True) interpolation matrices for the 3 upsample stages
    t1 = ((H + 3) // 4, (W + 3) // 4)
    t2 = ((H + 1) // 2, (W + 1) // 2)
    assert (H2, W2) == t1 and (H1, W1) == t2, "pyramid / upsample spatial sizes must line up"
    K1np = _interp_kron((H3, W3), t1)
    K2np = _interp_kron(t1, t2)
    K3np = _interp_kron(t2, (H, W))

    # level1..level5 1x1 convs: BN scale folded into weights, class-stacked over rows
    # (row r = n*ncls + o holds the weights of class o), packed as (5R, Cin) / (5R, 1).
    wl_blocks, bl_blocks = [], []
    for k in range(1, 6):
        wk = (np.asarray(params[f'level{k}_w'], np.float32).reshape(ncls, Cin)
              * np.asarray(params[f'level{k}_s'], np.float32)[:, None])
        bk = np.asarray(params[f'level{k}_b'], np.float32)[:, None]
        wl_blocks.append(np.tile(wk, (N, 1)))
        bl_blocks.append(np.tile(bk, (N, 1)))
    WLnp = np.concatenate(wl_blocks, axis=0).astype(np.float32)        # (5R, Cin)
    BLnp = np.concatenate(bl_blocks, axis=0).astype(np.float32)        # (5R, 1)

    S0, S1, S2, S3 = H * W, H1 * W1, H2 * W2, H3 * W3

    # device-side constants (captured as jit constants; folding never re-runs per call)
    M1, B1 = jnp.asarray(M1np), jnp.asarray(b1np)
    M2, B2 = jnp.asarray(M2np), jnp.asarray(b2np)
    M3, B3 = jnp.asarray(M3np), jnp.asarray(b3np)
    K1, K2, K3 = jnp.asarray(K1np), jnp.asarray(K2np), jnp.asarray(K3np)
    WL, BL = jnp.asarray(WLnp), jnp.asarray(BLnp)

    def kernel(xr_ref, m1_ref, b1_ref, m2_ref, b2_ref, m3_ref, b3_ref,
               k1_ref, k2_ref, k3_ref, wl_ref, bl_ref, o_ref):
        f32 = jnp.float32
        relu = lambda v: jnp.maximum(v, 0.0)

        xr = xr_ref[...]                                    # (R, Cin*S0), class-stacked rows

        # ---- strided-conv pyramid: one folded conv+BN matmul per layer (+ bias + ReLU)
        h1 = relu(jnp.dot(xr, m1_ref[...], preferred_element_type=f32) + b1_ref[...])  # branch3
        h2 = relu(jnp.dot(h1, m2_ref[...], preferred_element_type=f32) + b2_ref[...])  # branch2
        h3 = relu(jnp.dot(h2, m3_ref[...], preferred_element_type=f32) + b3_ref[...])  # branch1

        def level(k, act, s):
            # 1x1 conv + folded BN + ReLU on the class-stacked slab: per-row weights
            # broadcast along lanes (VPU FMA); channel slices computed once per channel.
            w = wl_ref[k * R:(k + 1) * R, :]                # (R, Cin)
            b = bl_ref[k * R:(k + 1) * R, :]                # (R, 1)
            acc = w[:, 0:1] * act[:, 0:s]
            for c in range(1, Cin):
                acc = acc + w[:, c:c + 1] * act[:, c * s:(c + 1) * s]
            return relu(acc + b)

        # ---- pyramid of level convs + bilinear upsamples (ONE dot per upsample stage)
        out = level(0, h3, S3)                                                   # level1(branch1)
        out = level(1, h2, S2) + jnp.dot(out, k1_ref[...], preferred_element_type=f32)
        out = level(2, h1, S1) + jnp.dot(out, k2_ref[...], preferred_element_type=f32)
        up = jnp.dot(out, k3_ref[...], preferred_element_type=f32)               # (R, S0)

        l4 = level(3, xr, S0)                                                    # level4(x)

        # level5: global average pool per channel, then 1x1 conv (+BN+ReLU) -> (R, 1)
        w5 = wl_ref[4 * R:5 * R, :]
        b5 = bl_ref[4 * R:5 * R, :]
        acc5 = w5[:, 0:1] * jnp.mean(xr[:, 0:S0], axis=1, keepdims=True)
        for c in range(1, Cin):
            acc5 = acc5 + w5[:, c:c + 1] * jnp.mean(xr[:, c * S0:(c + 1) * S0],
                                                    axis=1, keepdims=True)
        l5 = relu(acc5 + b5)

        o_ref[...] = l4 * up + l5                           # single lane-dense (R, S0) store

    fused = pl.pallas_call(
        kernel,
        out_shape=jax.ShapeDtypeStruct((R, S0), jnp.float32),
        in_specs=[_VMEM] * 12,
        out_specs=_VMEM,
    )

    @jax.jit
    def forward(x):
        xf = x.reshape(N, Cin * S0)
        # class-stacked activation rows: row n*ncls + o = image n (cheap XLA broadcast)
        xr = jnp.broadcast_to(xf[:, None, :], (N, ncls, Cin * S0)).reshape(R, Cin * S0)
        out_flat = fused(xr, M1, B1, M2, B2, M3, B3, K1, K2, K3, WL, BL)
        return out_flat.reshape(N, ncls, H, W)              # free view (row = n*ncls + o)

    return forward


# ------------------------------ pure-JAX reference ------------------------------

def _cbr_ref(x, w, s, b, stride, pad):
    y = lax.conv_general_dilated(x, w, (stride, stride), [(pad, pad), (pad, pad)],
                                 dimension_numbers=('NCHW', 'OIHW', 'NCHW'),
                                 precision=_HIGHEST)
    return jnp.maximum(y * s[None, :, None, None] + b[None, :, None, None], 0.0)


def _interp_ref(x, out_hw):
    N, C, h, w = x.shape
    A = jnp.asarray(_interp_matrix(out_hw[0], h))
    B = jnp.asarray(_interp_matrix(out_hw[1], w))
    return jnp.einsum('ip,ncpq,jq->ncij', A, x, B, precision=_HIGHEST)


def apn_ref(x, p):
    N, Cin, H, W = x.shape
    b3 = _cbr_ref(x, p['conv1_w'], p['conv1_s'], p['conv1_b'], 2, 1)
    b2 = _cbr_ref(b3, p['conv2_w'], p['conv2_s'], p['conv2_b'], 2, 2)
    b1 = _cbr_ref(b2, p['conv3_w'], p['conv3_s'], p['conv3_b'], 2, 3)
    out = _cbr_ref(b1, p['level1_w'], p['level1_s'], p['level1_b'], 1, 0)
    out = _cbr_ref(b2, p['level2_w'], p['level2_s'], p['level2_b'], 1, 0) \
        + _interp_ref(out, ((H + 3) // 4, (W + 3) // 4))
    out = _cbr_ref(b3, p['level3_w'], p['level3_s'], p['level3_b'], 1, 0) \
        + _interp_ref(out, ((H + 1) // 2, (W + 1) // 2))
    out = _cbr_ref(x, p['level4_w'], p['level4_s'], p['level4_b'], 1, 0) \
        * _interp_ref(out, (H, W))
    pooled = jnp.mean(x, axis=(2, 3), keepdims=True)
    l5 = _cbr_ref(pooled, p['level5_w'], p['level5_s'], p['level5_b'], 1, 0)
    return l5 + out


# ------------------------------ params & main ------------------------------

def make_params(key, in_channels, nclass):
    # BatchNorm folded into per-channel (scale, bias), deterministic values.
    def bn(cout, k):
        s = 1.0 + 0.05 * jnp.arange(cout, dtype=jnp.float32) + 0.01 * k
        b = 0.02 * jnp.arange(cout, dtype=jnp.float32) - 0.03 * k
        return s, b

    keys = jax.random.split(key, 8)
    p = {}
    specs = [('conv1', in_channels, in_channels, 3),
             ('conv2', in_channels, in_channels, 5),
             ('conv3', in_channels, in_channels, 7),
             ('level1', in_channels, nclass, 1),
             ('level2', in_channels, nclass, 1),
             ('level3', in_channels, nclass, 1),
             ('level4', in_channels, nclass, 1),
             ('level5', in_channels, nclass, 1)]
    for i, (name, cin, cout, k) in enumerate(specs):
        p[name + '_w'] = 0.1 * jax.random.normal(keys[i], (cout, cin, k, k), jnp.float32)
        p[name + '_s'], p[name + '_b'] = bn(cout, i)
    return p


if __name__ == "__main__":
    key = jax.random.PRNGKey(0)
    kx, kp = jax.random.split(key)

    batch, in_channels, nclass, H, W = 2, 4, 6, 16, 16
    x = jax.random.normal(kx, (batch, in_channels, H, W), jnp.float32)
    params = make_params(kp, in_channels, nclass)

    apn_forward = make_apn_forward(params, x.shape)       # fold operators once (off hot path)
    out = jax.block_until_ready(apn_forward(x))
    ref = jax.block_until_ready(apn_ref(x, params))

    assert out.shape == (batch, nclass, H, W)
    np.testing.assert_allclose(np.asarray(out), np.asarray(ref), rtol=2e-3, atol=2e-3)

    print("KERNEL_OK")
</pallas_src>

<mosaic_0001>
module attributes {stable_mosaic.version = 11 : i64} {
  func.func @kernel(%arg0: memref<12x1024xf32, #tpu.memory_space<vmem>>, %arg1: memref<1024x256xf32, #tpu.memory_space<vmem>>, %arg2: memref<1x256xf32, #tpu.memory_space<vmem>>, %arg3: memref<256x64xf32, #tpu.memory_space<vmem>>, %arg4: memref<1x64xf32, #tpu.memory_space<vmem>>, %arg5: memref<64x16xf32, #tpu.memory_space<vmem>>, %arg6: memref<1x16xf32, #tpu.memory_space<vmem>>, %arg7: memref<4x16xf32, #tpu.memory_space<vmem>>, %arg8: memref<16x64xf32, #tpu.memory_space<vmem>>, %arg9: memref<64x256xf32, #tpu.memory_space<vmem>>, %arg10: memref<60x4xf32, #tpu.memory_space<vmem>>, %arg11: memref<60x1xf32, #tpu.memory_space<vmem>>, %arg12: memref<12x256xf32, #tpu.memory_space<vmem>>) attributes {dimension_semantics = [], scalar_prefetch = 0 : i64, scratch_operands = 0 : i64, tpu.core_type = #tpu.core_type<tc>} {
    %c0 = arith.constant 0 : index
    %c0_0 = arith.constant 0 : index
    %0 = vector.load %arg0[%c0, %c0_0] : memref<12x1024xf32, #tpu.memory_space<vmem>>, vector<12x1024xf32>
    %c0_1 = arith.constant 0 : index
    %c0_2 = arith.constant 0 : index
    %1 = vector.load %arg1[%c0_1, %c0_2] : memref<1024x256xf32, #tpu.memory_space<vmem>>, vector<1024x256xf32>
    %cst = arith.constant dense<0.000000e+00> : vector<12x256xf32>
    %2 = tpu.matmul %0, %1, %cst {dimension_numbers = #tpu.dot_dimension_numbers<[1], [0], [0], [1], [0, 0, 1, 1], [], []>} : vector<12x1024xf32>, vector<1024x256xf32>, vector<12x256xf32> -> vector<12x256xf32>
    %c0_3 = arith.constant 0 : index
    %c0_4 = arith.constant 0 : index
    %3 = vector.load %arg2[%c0_3, %c0_4] : memref<1x256xf32, #tpu.memory_space<vmem>>, vector<1x256xf32>
    %4 = vector.broadcast %3 : vector<1x256xf32> to vector<12x256xf32>
    %5 = arith.addf %2, %4 : vector<12x256xf32>
    %cst_5 = arith.constant 0.000000e+00 : f32
    %6 = vector.broadcast %cst_5 : f32 to vector<12x256xf32>
    %7 = arith.maximumf %5, %6 : vector<12x256xf32>
    %c0_6 = arith.constant 0 : index
    %c0_7 = arith.constant 0 : index
    %8 = vector.load %arg3[%c0_6, %c0_7] : memref<256x64xf32, #tpu.memory_space<vmem>>, vector<256x64xf32>
    %cst_8 = arith.constant dense<0.000000e+00> : vector<12x64xf32>
    %9 = tpu.matmul %7, %8, %cst_8 {dimension_numbers = #tpu.dot_dimension_numbers<[1], [0], [0], [1], [0, 0, 1, 1], [], []>} : vector<12x256xf32>, vector<256x64xf32>, vector<12x64xf32> -> vector<12x64xf32>
    %c0_9 = arith.constant 0 : index
    %c0_10 = arith.constant 0 : index
    %10 = vector.load %arg4[%c0_9, %c0_10] : memref<1x64xf32, #tpu.memory_space<vmem>>, vector<1x64xf32>
    %11 = vector.broadcast %10 : vector<1x64xf32> to vector<12x64xf32>
    %12 = arith.addf %9, %11 : vector<12x64xf32>
    %cst_11 = arith.constant 0.000000e+00 : f32
    %13 = vector.broadcast %cst_11 : f32 to vector<12x64xf32>
    %14 = arith.maximumf %12, %13 : vector<12x64xf32>
    %c0_12 = arith.constant 0 : index
    %c0_13 = arith.constant 0 : index
    %15 = vector.load %arg5[%c0_12, %c0_13] : memref<64x16xf32, #tpu.memory_space<vmem>>, vector<64x16xf32>
    %cst_14 = arith.constant dense<0.000000e+00> : vector<12x16xf32>
    %16 = tpu.matmul %14, %15, %cst_14 {dimension_numbers = #tpu.dot_dimension_numbers<[1], [0], [0], [1], [0, 0, 1, 1], [], []>} : vector<12x64xf32>, vector<64x16xf32>, vector<12x16xf32> -> vector<12x16xf32>
    %c0_15 = arith.constant 0 : index
    %c0_16 = arith.constant 0 : index
    %17 = vector.load %arg6[%c0_15, %c0_16] : memref<1x16xf32, #tpu.memory_space<vmem>>, vector<1x16xf32>
    %18 = vector.broadcast %17 : vector<1x16xf32> to vector<12x16xf32>
    %19 = arith.addf %16, %18 : vector<12x16xf32>
    %cst_17 = arith.constant 0.000000e+00 : f32
    %20 = vector.broadcast %cst_17 : f32 to vector<12x16xf32>
    %21 = arith.maximumf %19, %20 : vector<12x16xf32>
    %c0_18 = arith.constant 0 : index
    %c0_19 = arith.constant 0 : index
    %22 = vector.load %arg10[%c0_18, %c0_19] : memref<60x4xf32, #tpu.memory_space<vmem>>, vector<12x4xf32>
    %c0_20 = arith.constant 0 : index
    %c0_21 = arith.constant 0 : index
    %23 = vector.load %arg11[%c0_20, %c0_21] : memref<60x1xf32, #tpu.memory_space<vmem>>, vector<12x1xf32>
    %24 = vector.extract_strided_slice %22 {offsets = [0, 0], sizes = [12, 1], strides = [1, 1]} : vector<12x4xf32> to vector<12x1xf32>
    %25 = vector.extract_strided_slice %21 {offsets = [0, 0], sizes = [12, 4], strides = [1, 1]} : vector<12x16xf32> to vector<12x4xf32>
    %26 = vector.broadcast %24 : vector<12x1xf32> to vector<12x4xf32>
    %27 = arith.mulf %26, %25 : vector<12x4xf32>
    %28 = vector.extract_strided_slice %22 {offsets = [0, 1], sizes = [12, 1], strides = [1, 1]} : vector<12x4xf32> to vector<12x1xf32>
    %29 = vector.extract_strided_slice %21 {offsets = [0, 4], sizes = [12, 4], strides = [1, 1]} : vector<12x16xf32> to vector<12x4xf32>
    %30 = vector.broadcast %28 : vector<12x1xf32> to vector<12x4xf32>
    %31 = arith.mulf %30, %29 : vector<12x4xf32>
    %32 = arith.addf %27, %31 : vector<12x4xf32>
    %33 = vector.extract_strided_slice %22 {offsets = [0, 2], sizes = [12, 1], strides = [1, 1]} : vector<12x4xf32> to vector<12x1xf32>
    %34 = vector.extract_strided_slice %21 {offsets = [0, 8], sizes = [12, 4], strides = [1, 1]} : vector<12x16xf32> to vector<12x4xf32>
    %35 = vector.broadcast %33 : vector<12x1xf32> to vector<12x4xf32>
    %36 = arith.mulf %35, %34 : vector<12x4xf32>
    %37 = arith.addf %32, %36 : vector<12x4xf32>
    %38 = vector.extract_strided_slice %22 {offsets = [0, 3], sizes = [12, 1], strides = [1, 1]} : vector<12x4xf32> to vector<12x1xf32>
    %39 = vector.extract_strided_slice %21 {offsets = [0, 12], sizes = [12, 4], strides = [1, 1]} : vector<12x16xf32> to vector<12x4xf32>
    %40 = vector.broadcast %38 : vector<12x1xf32> to vector<12x4xf32>
    %41 = arith.mulf %40, %39 : vector<12x4xf32>
    %42 = arith.addf %37, %41 : vector<12x4xf32>
    %43 = vector.broadcast %23 : vector<12x1xf32> to vector<12x4xf32>
    %44 = arith.addf %42, %43 : vector<12x4xf32>
    %cst_22 = arith.constant 0.000000e+00 : f32
    %45 = vector.broadcast %cst_22 : f32 to vector<12x4xf32>
    %46 = arith.maximumf %44, %45 : vector<12x4xf32>
    %c12 = arith.constant 12 : index
    %c0_23 = arith.constant 0 : index
    %47 = vector.load %arg10[%c12, %c0_23] : memref<60x4xf32, #tpu.memory_space<vmem>>, vector<12x4xf32>
    %c12_24 = arith.constant 12 : index
    %c0_25 = arith.constant 0 : index
    %48 = vector.load %arg11[%c12_24, %c0_25] : memref<60x1xf32, #tpu.memory_space<vmem>>, vector<12x1xf32>
    %49 = vector.extract_strided_slice %47 {offsets = [0, 0], sizes = [12, 1], strides = [1, 1]} : vector<12x4xf32> to vector<12x1xf32>
    %50 = vector.extract_strided_slice %14 {offsets = [0, 0], sizes = [12, 16], strides = [1, 1]} : vector<12x64xf32> to vector<12x16xf32>
    %51 = vector.broadcast %49 : vector<12x1xf32> to vector<12x16xf32>
    %52 = arith.mulf %51, %50 : vector<12x16xf32>
    %53 = vector.extract_strided_slice %47 {offsets = [0, 1], sizes = [12, 1], strides = [1, 1]} : vector<12x4xf32> to vector<12x1xf32>
    %54 = vector.extract_strided_slice %14 {offsets = [0, 16], sizes = [12, 16], strides = [1, 1]} : vector<12x64xf32> to vector<12x16xf32>
    %55 = vector.broadcast %53 : vector<12x1xf32> to vector<12x16xf32>
    %56 = arith.mulf %55, %54 : vector<12x16xf32>
    %57 = arith.addf %52, %56 : vector<12x16xf32>
    %58 = vector.extract_strided_slice %47 {offsets = [0, 2], sizes = [12, 1], strides = [1, 1]} : vector<12x4xf32> to vector<12x1xf32>
    %59 = vector.extract_strided_slice %14 {offsets = [0, 32], sizes = [12, 16], strides = [1, 1]} : vector<12x64xf32> to vector<12x16xf32>
    %60 = vector.broadcast %58 : vector<12x1xf32> to vector<12x16xf32>
    %61 = arith.mulf %60, %59 : vector<12x16xf32>
    %62 = arith.addf %57, %61 : vector<12x16xf32>
    %63 = vector.extract_strided_slice %47 {offsets = [0, 3], sizes = [12, 1], strides = [1, 1]} : vector<12x4xf32> to vector<12x1xf32>
    %64 = vector.extract_strided_slice %14 {offsets = [0, 48], sizes = [12, 16], strides = [1, 1]} : vector<12x64xf32> to vector<12x16xf32>
    %65 = vector.broadcast %63 : vector<12x1xf32> to vector<12x16xf32>
    %66 = arith.mulf %65, %64 : vector<12x16xf32>
    %67 = arith.addf %62, %66 : vector<12x16xf32>
    %68 = vector.broadcast %48 : vector<12x1xf32> to vector<12x16xf32>
    %69 = arith.addf %67, %68 : vector<12x16xf32>
    %cst_26 = arith.constant 0.000000e+00 : f32
    %70 = vector.broadcast %cst_26 : f32 to vector<12x16xf32>
    %71 = arith.maximumf %69, %70 : vector<12x16xf32>
    %c0_27 = arith.constant 0 : index
    %c0_28 = arith.constant 0 : index
    %72 = vector.load %arg7[%c0_27, %c0_28] : memref<4x16xf32, #tpu.memory_space<vmem>>, vector<4x16xf32>
    %cst_29 = arith.constant dense<0.000000e+00> : vector<12x16xf32>
    %73 = tpu.matmul %46, %72, %cst_29 {dimension_numbers = #tpu.dot_dimension_numbers<[1], [0], [0], [1], [0, 0, 1, 1], [], []>} : vector<12x4xf32>, vector<4x16xf32>, vector<12x16xf32> -> vector<12x16xf32>
    %74 = arith.addf %71, %73 : vector<12x16xf32>
    %c24 = arith.constant 24 : index
    %c0_30 = arith.constant 0 : index
    %75 = vector.load %arg10[%c24, %c0_30] : memref<60x4xf32, #tpu.memory_space<vmem>>, vector<12x4xf32>
    %c24_31 = arith.constant 24 : index
    %c0_32 = arith.constant 0 : index
    %76 = vector.load %arg11[%c24_31, %c0_32] : memref<60x1xf32, #tpu.memory_space<vmem>>, vector<12x1xf32>
    %77 = vector.extract_strided_slice %75 {offsets = [0, 0], sizes = [12, 1], strides = [1, 1]} : vector<12x4xf32> to vector<12x1xf32>
    %78 = vector.extract_strided_slice %7 {offsets = [0, 0], sizes = [12, 64], strides = [1, 1]} : vector<12x256xf32> to vector<12x64xf32>
    %79 = vector.broadcast %77 : vector<12x1xf32> to vector<12x64xf32>
    %80 = arith.mulf %79, %78 : vector<12x64xf32>
    %81 = vector.extract_strided_slice %75 {offsets = [0, 1], sizes = [12, 1], strides = [1, 1]} : vector<12x4xf32> to vector<12x1xf32>
    %82 = vector.extract_strided_slice %7 {offsets = [0, 64], sizes = [12, 64], strides = [1, 1]} : vector<12x256xf32> to vector<12x64xf32>
    %83 = vector.broadcast %81 : vector<12x1xf32> to vector<12x64xf32>
    %84 = arith.mulf %83, %82 : vector<12x64xf32>
    %85 = arith.addf %80, %84 : vector<12x64xf32>
    %86 = vector.extract_strided_slice %75 {offsets = [0, 2], sizes = [12, 1], strides = [1, 1]} : vector<12x4xf32> to vector<12x1xf32>
    %87 = vector.extract_strided_slice %7 {offsets = [0, 128], sizes = [12, 64], strides = [1, 1]} : vector<12x256xf32> to vector<12x64xf32>
    %88 = vector.broadcast %86 : vector<12x1xf32> to vector<12x64xf32>
    %89 = arith.mulf %88, %87 : vector<12x64xf32>
    %90 = arith.addf %85, %89 : vector<12x64xf32>
    %91 = vector.extract_strided_slice %75 {offsets = [0, 3], sizes = [12, 1], strides = [1, 1]} : vector<12x4xf32> to vector<12x1xf32>
    %92 = vector.extract_strided_slice %7 {offsets = [0, 192], sizes = [12, 64], strides = [1, 1]} : vector<12x256xf32> to vector<12x64xf32>
    %93 = vector.broadcast %91 : vector<12x1xf32> to vector<12x64xf32>
    %94 = arith.mulf %93, %92 : vector<12x64xf32>
    %95 = arith.addf %90, %94 : vector<12x64xf32>
    %96 = vector.broadcast %76 : vector<12x1xf32> to vector<12x64xf32>
    %97 = arith.addf %95, %96 : vector<12x64xf32>
    %cst_33 = arith.constant 0.000000e+00 : f32
    %98 = vector.broadcast %cst_33 : f32 to vector<12x64xf32>
    %99 = arith.maximumf %97, %98 : vector<12x64xf32>
    %c0_34 = arith.constant 0 : index
    %c0_35 = arith.constant 0 : index
    %100 = vector.load %arg8[%c0_34, %c0_35] : memref<16x64xf32, #tpu.memory_space<vmem>>, vector<16x64xf32>
    %cst_36 = arith.constant dense<0.000000e+00> : vector<12x64xf32>
    %101 = tpu.matmul %74, %100, %cst_36 {dimension_numbers = #tpu.dot_dimension_numbers<[1], [0], [0], [1], [0, 0, 1, 1], [], []>} : vector<12x16xf32>, vector<16x64xf32>, vector<12x64xf32> -> vector<12x64xf32>
    %102 = arith.addf %99, %101 : vector<12x64xf32>
    %c0_37 = arith.constant 0 : index
    %c0_38 = arith.constant 0 : index
    %103 = vector.load %arg9[%c0_37, %c0_38] : memref<64x256xf32, #tpu.memory_space<vmem>>, vector<64x256xf32>
    %cst_39 = arith.constant dense<0.000000e+00> : vector<12x256xf32>
    %104 = tpu.matmul %102, %103, %cst_39 {dimension_numbers = #tpu.dot_dimension_numbers<[1], [0], [0], [1], [0, 0, 1, 1], [], []>} : vector<12x64xf32>, vector<64x256xf32>, vector<12x256xf32> -> vector<12x256xf32>
    %c36 = arith.constant 36 : index
    %c0_40 = arith.constant 0 : index
    %105 = vector.load %arg10[%c36, %c0_40] : memref<60x4xf32, #tpu.memory_space<vmem>>, vector<12x4xf32>
    %c36_41 = arith.constant 36 : index
    %c0_42 = arith.constant 0 : index
    %106 = vector.load %arg11[%c36_41, %c0_42] : memref<60x1xf32, #tpu.memory_space<vmem>>, vector<12x1xf32>
    %107 = vector.extract_strided_slice %105 {offsets = [0, 0], sizes = [12, 1], strides = [1, 1]} : vector<12x4xf32> to vector<12x1xf32>
    %108 = vector.extract_strided_slice %0 {offsets = [0, 0], sizes = [12, 256], strides = [1, 1]} : vector<12x1024xf32> to vector<12x256xf32>
    %109 = vector.broadcast %107 : vector<12x1xf32> to vector<12x256xf32>
    %110 = arith.mulf %109, %108 : vector<12x256xf32>
    %111 = vector.extract_strided_slice %105 {offsets = [0, 1], sizes = [12, 1], strides = [1, 1]} : vector<12x4xf32> to vector<12x1xf32>
    %112 = vector.extract_strided_slice %0 {offsets = [0, 256], sizes = [12, 256], strides = [1, 1]} : vector<12x1024xf32> to vector<12x256xf32>
    %113 = vector.broadcast %111 : vector<12x1xf32> to vector<12x256xf32>
    %114 = arith.mulf %113, %112 : vector<12x256xf32>
    %115 = arith.addf %110, %114 : vector<12x256xf32>
    %116 = vector.extract_strided_slice %105 {offsets = [0, 2], sizes = [12, 1], strides = [1, 1]} : vector<12x4xf32> to vector<12x1xf32>
    %117 = vector.extract_strided_slice %0 {offsets = [0, 512], sizes = [12, 256], strides = [1, 1]} : vector<12x1024xf32> to vector<12x256xf32>
    %118 = vector.broadcast %116 : vector<12x1xf32> to vector<12x256xf32>
    %119 = arith.mulf %118, %117 : vector<12x256xf32>
    %120 = arith.addf %115, %119 : vector<12x256xf32>
    %121 = vector.extract_strided_slice %105 {offsets = [0, 3], sizes = [12, 1], strides = [1, 1]} : vector<12x4xf32> to vector<12x1xf32>
    %122 = vector.extract_strided_slice %0 {offsets = [0, 768], sizes = [12, 256], strides = [1, 1]} : vector<12x1024xf32> to vector<12x256xf32>
    %123 = vector.broadcast %121 : vector<12x1xf32> to vector<12x256xf32>
    %124 = arith.mulf %123, %122 : vector<12x256xf32>
    %125 = arith.addf %120, %124 : vector<12x256xf32>
    %126 = vector.broadcast %106 : vector<12x1xf32> to vector<12x256xf32>
    %127 = arith.addf %125, %126 : vector<12x256xf32>
    %cst_43 = arith.constant 0.000000e+00 : f32
    %128 = vector.broadcast %cst_43 : f32 to vector<12x256xf32>
    %129 = arith.maximumf %127, %128 : vector<12x256xf32>
    %c48 = arith.constant 48 : index
    %c0_44 = arith.constant 0 : index
    %130 = vector.load %arg10[%c48, %c0_44] : memref<60x4xf32, #tpu.memory_space<vmem>>, vector<12x4xf32>
    %c48_45 = arith.constant 48 : index
    %c0_46 = arith.constant 0 : index
    %131 = vector.load %arg11[%c48_45, %c0_46] : memref<60x1xf32, #tpu.memory_space<vmem>>, vector<12x1xf32>
    %132 = vector.extract_strided_slice %130 {offsets = [0, 0], sizes = [12, 1], strides = [1, 1]} : vector<12x4xf32> to vector<12x1xf32>
    %133 = vector.extract_strided_slice %0 {offsets = [0, 0], sizes = [12, 256], strides = [1, 1]} : vector<12x1024xf32> to vector<12x256xf32>
    %cst_47 = arith.constant dense<0.000000e+00> : vector<12xf32>
    %134 = vector.multi_reduction <add>, %133, %cst_47 [1] : vector<12x256xf32> to vector<12xf32>
    %135 = vector.shape_cast %134 : vector<12xf32> to vector<12x1xf32>
    %cst_48 = arith.constant 2.560000e+02 : f32
    %136 = vector.broadcast %cst_48 : f32 to vector<12x1xf32>
    %137 = arith.divf %135, %136 : vector<12x1xf32>
    %138 = arith.mulf %132, %137 : vector<12x1xf32>
    %139 = vector.extract_strided_slice %130 {offsets = [0, 1], sizes = [12, 1], strides = [1, 1]} : vector<12x4xf32> to vector<12x1xf32>
    %140 = vector.extract_strided_slice %0 {offsets = [0, 256], sizes = [12, 256], strides = [1, 1]} : vector<12x1024xf32> to vector<12x256xf32>
    %cst_49 = arith.constant dense<0.000000e+00> : vector<12xf32>
    %141 = vector.multi_reduction <add>, %140, %cst_49 [1] : vector<12x256xf32> to vector<12xf32>
    %142 = vector.shape_cast %141 : vector<12xf32> to vector<12x1xf32>
    %cst_50 = arith.constant 2.560000e+02 : f32
    %143 = vector.broadcast %cst_50 : f32 to vector<12x1xf32>
    %144 = arith.divf %142, %143 : vector<12x1xf32>
    %145 = arith.mulf %139, %144 : vector<12x1xf32>
    %146 = arith.addf %138, %145 : vector<12x1xf32>
    %147 = vector.extract_strided_slice %130 {offsets = [0, 2], sizes = [12, 1], strides = [1, 1]} : vector<12x4xf32> to vector<12x1xf32>
    %148 = vector.extract_strided_slice %0 {offsets = [0, 512], sizes = [12, 256], strides = [1, 1]} : vector<12x1024xf32> to vector<12x256xf32>
    %cst_51 = arith.constant dense<0.000000e+00> : vector<12xf32>
    %149 = vector.multi_reduction <add>, %148, %cst_51 [1] : vector<12x256xf32> to vector<12xf32>
    %150 = vector.shape_cast %149 : vector<12xf32> to vector<12x1xf32>
    %cst_52 = arith.constant 2.560000e+02 : f32
    %151 = vector.broadcast %cst_52 : f32 to vector<12x1xf32>
    %152 = arith.divf %150, %151 : vector<12x1xf32>
    %153 = arith.mulf %147, %152 : vector<12x1xf32>
    %154 = arith.addf %146, %153 : vector<12x1xf32>
    %155 = vector.extract_strided_slice %130 {offsets = [0, 3], sizes = [12, 1], strides = [1, 1]} : vector<12x4xf32> to vector<12x1xf32>
    %156 = vector.extract_strided_slice %0 {offsets = [0, 768], sizes = [12, 256], strides = [1, 1]} : vector<12x1024xf32> to vector<12x256xf32>
    %cst_53 = arith.constant dense<0.000000e+00> : vector<12xf32>
    %157 = vector.multi_reduction <add>, %156, %cst_53 [1] : vector<12x256xf32> to vector<12xf32>
    %158 = vector.shape_cast %157 : vector<12xf32> to vector<12x1xf32>
    %cst_54 = arith.constant 2.560000e+02 : f32
    %159 = vector.broadcast %cst_54 : f32 to vector<12x1xf32>
    %160 = arith.divf %158, %159 : vector<12x1xf32>
    %161 = arith.mulf %155, %160 : vector<12x1xf32>
    %162 = arith.addf %154, %161 : vector<12x1xf32>
    %163 = arith.addf %162, %131 : vector<12x1xf32>
    %cst_55 = arith.constant 0.000000e+00 : f32
    %164 = vector.broadcast %cst_55 : f32 to vector<12x1xf32>
    %165 = arith.maximumf %163, %164 : vector<12x1xf32>
    %166 = arith.mulf %129, %104 : vector<12x256xf32>
    %167 = vector.broadcast %165 : vector<12x1xf32> to vector<12x256xf32>
    %168 = arith.addf %166, %167 : vector<12x256xf32>
    %c0_56 = arith.constant 0 : index
    %c0_57 = arith.constant 0 : index
    %169 = vector.load %arg12[%c0_56, %c0_57] : memref<12x256xf32, #tpu.memory_space<vmem>>, vector<12x256xf32>
    tpu.vector_store %arg12[%c0_56, %c0_57], %168 {strides = array<i32>} : memref<12x256xf32, #tpu.memory_space<vmem>>, vector<12x256xf32>,
    return
  }
}

</mosaic_0001>

<llo_original>
// kernel: forward.1
$region0: #{forward.1}
  #allocation0 [shape = 'u32[]', space=smem, size = 0x4, offset = 0x4, fixed_abs, tag = 'smem constant byte address 0x4 - core index']
  #allocation1 [shape = 'u32[144,128]{1,0:T(1,128)}', space=vmem, size = 0x12000, scoped, tag = 'internal scratch']
  %s0 = inlined_call_operand.vmem [shape: f32[12,1024], index: 0, kind: input, shape index: {}]
  %s1 = inlined_call_operand.hbm [shape: f32[1024,256], index: 1, kind: input, shape index: {}]
  %s2 = inlined_call_operand.vmem [shape: f32[1,256], index: 2, kind: input, shape index: {}]
  %s3 = inlined_call_operand.vmem [shape: f32[256,64], index: 3, kind: input, shape index: {}]
  %s4 = inlined_call_operand.vmem [shape: f32[1,64], index: 4, kind: input, shape index: {}]
  %s5 = inlined_call_operand.hbm [shape: f32[64,16], index: 5, kind: input, shape index: {}]
  %s6 = inlined_call_operand.vmem [shape: f32[1,16], index: 6, kind: input, shape index: {}]
  %s7 = inlined_call_operand.vmem [shape: f32[4,16], index: 7, kind: input, shape index: {}]
  %s8 = inlined_call_operand.vmem [shape: f32[16,64], index: 8, kind: input, shape index: {}]
  %s9 = inlined_call_operand.vmem [shape: f32[64,256], index: 9, kind: input, shape index: {}]
  %s10 = inlined_call_operand.vmem [shape: f32[60,4], index: 10, kind: input, shape index: {}]
  %s11 = inlined_call_operand.vmem [shape: f32[60,1], index: 11, kind: input, shape index: {}]
  %s12 = inlined_call_operand.vmem [shape: f32[12,256], index: 12, kind: output, shape index: {}]
  %s13 = sld [smem:[#allocation0]]
  $region66: #{forward.1} parent=0
    _
  %s15 = ssub.s32 1, %s13
  %s16 = scalar_select 0, %s15, %s13
  $region1: #{forward.1} parent=0
    #allocation2 [shape = 'u8[1048576]{0}', space=vmem, size = 0x100000, scoped, tag = 'input window, operand 1, single buffered']
    #allocation3 [shape = 's32[1]{0}', space=sflag, size = 0x4, scoped, tag = 'scoped memory for forward.1']
    #allocation4 [shape = 'u8[32768]{0}', space=vmem, size = 0x8000, scoped, tag = 'input window, operand 5, single buffered']
    #allocation5 [shape = 's32[1]{0}', space=sflag, size = 0x4, scoped, tag = 'scoped memory for forward.1']
    %17 = vsyncpa [#allocation3], 0
    %18 = vsyncpa [#allocation5], 0
    // Predicated region
    $region2: #{forward.1} parent=1 // pred_check
      _
    $region3: #{forward.1} parent=1 // pred_check_branch
      %20 = sbr.rel (0) target = $region5
    $region4: #{forward.1} parent=1 // pred_region
      _
    $region5: #{forward.1} parent=1 // pred_fallthru
      _
    // Predicated region
    $region6: #{forward.1} parent=1 // pred_check
      _
    $region7: #{forward.1} parent=1 // pred_check_branch
      %22 = sbr.rel (0) target = $region9
    $region8: #{forward.1} parent=1 // pred_region
      %s24 = ssub.s32 32768, 32768
      %25 = vsyncadd [#allocation3], %s24
      %s26 = sshll.u32 [#allocation2], 4
      %s27 = int_to_ptr.vmem [resolvable:$true] %s26
      %32 = dma.hbm_to_vmem [thread:$0]  %s1, 32768, %s27, [#allocation3], 256, 256, 16
    $region9: #{forward.1} parent=1 // pred_fallthru
      _
    // Predicated region
    $region10: #{forward.1} parent=1 // pred_check
      _
    $region11: #{forward.1} parent=1 // pred_check_branch
      %34 = sbr.rel (0) target = $region13
    $region12: #{forward.1} parent=1 // pred_region
      _
    $region13: #{forward.1} parent=1 // pred_fallthru
      _
    // Predicated region
    $region14: #{forward.1} parent=1 // pred_check
      _
    $region15: #{forward.1} parent=1 // pred_check_branch
      %36 = sbr.rel (0) target = $region17
    $region16: #{forward.1} parent=1 // pred_region
      _
    $region17: #{forward.1} parent=1 // pred_fallthru
      _
    // Predicated region
    $region18: #{forward.1} parent=1 // pred_check
      _
    $region19: #{forward.1} parent=1 // pred_check_branch
      %38 = sbr.rel (0) target = $region21
    $region20: #{forward.1} parent=1 // pred_region
      _
    $region21: #{forward.1} parent=1 // pred_fallthru
      _
    // Predicated region
    $region22: #{forward.1} parent=1 // pred_check
      _
    $region23: #{forward.1} parent=1 // pred_check_branch
      %40 = sbr.rel (0) target = $region25
    $region24: #{forward.1} parent=1 // pred_region
      %s42 = ssub.s32 1024, 1024
      %43 = vsyncadd [#allocation5], %s42
      %s44 = sshll.u32 [#allocation4], 4
      %s45 = int_to_ptr.vmem [resolvable:$true] %s44
      %50 = dma.hbm_to_vmem [thread:$0]  %s5, 1024, %s45, [#allocation5], 128, 128, 8
    $region25: #{forward.1} parent=1 // pred_fallthru
      _
    // Predicated region
    $region26: #{forward.1} parent=1 // pred_check
      _
    $region27: #{forward.1} parent=1 // pred_check_branch
      %52 = sbr.rel (0) target = $region29
    $region28: #{forward.1} parent=1 // pred_region
      _
    $region29: #{forward.1} parent=1 // pred_fallthru
      _
    // Predicated region
    $region30: #{forward.1} parent=1 // pred_check
      _
    $region31: #{forward.1} parent=1 // pred_check_branch
      %54 = sbr.rel (0) target = $region33
    $region32: #{forward.1} parent=1 // pred_region
      _
    $region33: #{forward.1} parent=1 // pred_fallthru
      _
    // Predicated region
    $region34: #{forward.1} parent=1 // pred_check
      _
    $region35: #{forward.1} parent=1 // pred_check_branch
      %56 = sbr.rel (0) target = $region37
    $region36: #{forward.1} parent=1 // pred_region
      _
    $region37: #{forward.1} parent=1 // pred_fallthru
      _
    // Predicated region
    $region38: #{forward.1} parent=1 // pred_check
      _
    $region39: #{forward.1} parent=1 // pred_check_branch
      %58 = sbr.rel (0) target = $region41
    $region40: #{forward.1} parent=1 // pred_region
      _
    $region41: #{forward.1} parent=1 // pred_fallthru
      _
    // Predicated region
    $region42: #{forward.1} parent=1 // pred_check
      _
    $region43: #{forward.1} parent=1 // pred_check_branch
      %60 = sbr.rel (0) target = $region45
    $region44: #{forward.1} parent=1 // pred_region
      _
    $region45: #{forward.1} parent=1 // pred_fallthru
      _
    // Predicated region
    $region46: #{forward.1} parent=1 // pred_check
      _
    $region47: #{forward.1} parent=1 // pred_check_branch
      %62 = sbr.rel (0) target = $region49
    $region48: #{forward.1} parent=1 // pred_region
      _
    $region49: #{forward.1} parent=1 // pred_fallthru
      _
    // Predicated region
    $region50: #{forward.1} parent=1 // pred_check
      _
    $region51: #{forward.1} parent=1 // pred_check_branch
      %64 = sbr.rel (0) target = $region53
    $region52: #{forward.1} parent=1 // pred_region
      %65 = dma.done [#allocation3], 32768
    $region53: #{forward.1} parent=1 // pred_fallthru
      _
    // Predicated region
    $region54: #{forward.1} parent=1 // pred_check
      _
    $region55: #{forward.1} parent=1 // pred_check_branch
      %67 = sbr.rel (0) target = $region57
    $region56: #{forward.1} parent=1 // pred_region
      %68 = dma.done [#allocation5], 1024
    $region57: #{forward.1} parent=1 // pred_fallthru
      _
    %v69 = vld [vmem:[%s0] sm:$0xff]
    %v70 = vld [vmem:[%s0 + $0x8] sm:$0xff]
    %v71 = vld [vmem:[%s0 + $0x10] sm:$0xff]
    %v72 = vld [vmem:[%s0 + $0x18] sm:$0xff]
    %v73 = vld [vmem:[%s0 + $0x20] sm:$0xff]
    %v74 = vld [vmem:[%s0 + $0x28] sm:$0xff]
    %v75 = vld [vmem:[%s0 + $0x30] sm:$0xff]
    %v76 = vld [vmem:[%s0 + $0x38] sm:$0xff]
    %v77 = vld [vmem:[%s0 + $0x40] sm:$0xf]
    %v78 = vld [vmem:[%s0 + $0x48] sm:$0xf]
    %v79 = vld [vmem:[%s0 + $0x50] sm:$0xf]
    %v80 = vld [vmem:[%s0 + $0x58] sm:$0xf]
    %v81 = vld [vmem:[%s0 + $0x60] sm:$0xf]
    %v82 = vld [vmem:[%s0 + $0x68] sm:$0xf]
    %v83 = vld [vmem:[%s0 + $0x70] sm:$0xf]
    %v84 = vld [vmem:[%s0 + $0x78] sm:$0xf]
    %v85 = vld [vmem:[#allocation2] sm:$0xff]
    %v86 = vld [vmem:[#allocation2 + $0x8] sm:$0xff]
    %v87 = vld [vmem:[#allocation2 + $0x10] sm:$0xff]
    %v88 = vld [vmem:[#allocation2 + $0x18] sm:$0xff]
    %v89 = vld [vmem:[#allocation2 + $0x20] sm:$0xff]
    %v90 = vld [vmem:[#allocation2 + $0x28] sm:$0xff]
    %v91 = vld [vmem:[#allocation2 + $0x30] sm:$0xff]
    %v92 = vld [vmem:[#allocation2 + $0x38] sm:$0xff]
    %v93 = vld [vmem:[#allocation2 + $0x40] sm:$0xff]
    %v94 = vld [vmem:[#allocation2 + $0x48] sm:$0xff]
    %v95 = vld [vmem:[#allocation2 + $0x50] sm:$0xff]
    %v96 = vld [vmem:[#allocation2 + $0x58] sm:$0xff]
    %v97 = vld [vmem:[#allocation2 + $0x60] sm:$0xff]
    %v98 = vld [vmem:[#allocation2 + $0x68] sm:$0xff]
    %v99 = vld [vmem:[#allocation2 + $0x70] sm:$0xff]
    %v100 = vld [vmem:[#allocation2 + $0x78] sm:$0xff]
    %v101 = vld [vmem:[#allocation2 + $0x80] sm:$0xff]
    %v102 = vld [vmem:[#allocation2 + $0x88] sm:$0xff]
    %v103 = vld [vmem:[#allocation2 + $0x90] sm:$0xff]
    %v104 = vld [vmem:[#allocation2 + $0x98] sm:$0xff]
    %v105 = vld [vmem:[#allocation2 + $0xa0] sm:$0xff]
    %v106 = vld [vmem:[#allocation2 + $0xa8] sm:$0xff]
    %v107 = vld [vmem:[#allocation2 + $0xb0] sm:$0xff]
    %v108 = vld [vmem:[#allocation2 + $0xb8] sm:$0xff]
    %v109 = vld [vmem:[#allocation2 + $0xc0] sm:$0xff]
    %v110 = vld [vmem:[#allocation2 + $0xc8] sm:$0xff]
    %v111 = vld [vmem:[#allocation2 + $0xd0] sm:$0xff]
    %v112 = vld [vmem:[#allocation2 + $0xd8] sm:$0xff]
    %v113 = vld [vmem:[#allocation2 + $0xe0] sm:$0xff]
    %v114 = vld [vmem:[#allocation2 + $0xe8] sm:$0xff]
    %v115 = vld [vmem:[#allocation2 + $0xf0] sm:$0xff]
    %v116 = vld [vmem:[#allocation2 + $0xf8] sm:$0xff]
    %v117 = vld [vmem:[#allocation2 + $0x100] sm:$0xff]
    %v118 = vld [vmem:[#allocation2 + $0x108] sm:$0xff]
    %v119 = vld [vmem:[#allocation2 + $0x110] sm:$0xff]
    %v120 = vld [vmem:[#allocation2 + $0x118] sm:$0xff]
    %v121 = vld [vmem:[#allocation2 + $0x120] sm:$0xff]
    %v122 = vld [vmem:[#allocation2 + $0x128] sm:$0xff]
    %v123 = vld [vmem:[#allocation2 + $0x130] sm:$0xff]
    %v124 = vld [vmem:[#allocation2 + $0x138] sm:$0xff]
    %v125 = vld [vmem:[#allocation2 + $0x140] sm:$0xff]
    %v126 = vld [vmem:[#allocation2 + $0x148] sm:$0xff]
    %v127 = vld [vmem:[#allocation2 + $0x150] sm:$0xff]
    %v128 = vld [vmem:[#allocation2 + $0x158] sm:$0xff]
    %v129 = vld [vmem:[#allocation2 + $0x160] sm:$0xff]
    %v130 = vld [vmem:[#allocation2 + $0x168] sm:$0xff]
    %v131 = vld [vmem:[#allocation2 + $0x170] sm:$0xff]
    %v132 = vld [vmem:[#allocation2 + $0x178] sm:$0xff]
    %v133 = vld [vmem:[#allocation2 + $0x180] sm:$0xff]
    %v134 = vld [vmem:[#allocation2 + $0x188] sm:$0xff]
    %v135 = vld [vmem:[#allocation2 + $0x190] sm:$0xff]
    %v136 = vld [vmem:[#allocation2 + $0x198] sm:$0xff]
    %v137 = vld [vmem:[#allocation2 + $0x1a0] sm:$0xff]
    %v138 = vld [vmem:[#allocation2 + $0x1a8] sm:$0xff]
    %v139 = vld [vmem:[#allocation2 + $0x1b0] sm:$0xff]
    %v140 = vld [vmem:[#allocation2 + $0x1b8] sm:$0xff]
    %v141 = vld [vmem:[#allocation2 + $0x1c0] sm:$0xff]
    %v142 = vld [vmem:[#allocation2 + $0x1c8] sm:$0xff]
    %v143 = vld [vmem:[#allocation2 + $0x1d0] sm:$0xff]
    %v144 = vld [vmem:[#allocation2 + $0x1d8] sm:$0xff]
    %v145 = vld [vmem:[#allocation2 + $0x1e0] sm:$0xff]
    %v146 = vld [vmem:[#allocation2 + $0x1e8] sm:$0xff]
    %v147 = vld [vmem:[#allocation2 + $0x1f0] sm:$0xff]
    %v148 = vld [vmem:[#allocation2 + $0x1f8] sm:$0xff]
    %v149 = vld [vmem:[#allocation2 + $0x200] sm:$0xff]
    %v150 = vld [vmem:[#allocation2 + $0x208] sm:$0xff]
    %v151 = vld [vmem:[#allocation2 + $0x210] sm:$0xff]
    %v152 = vld [vmem:[#allocation2 + $0x218] sm:$0xff]
    %v153 = vld [vmem:[#allocation2 + $0x220] sm:$0xff]
    %v154 = vld [vmem:[#allocation2 + $0x228] sm:$0xff]
    %v155 = vld [vmem:[#allocation2 + $0x230] sm:$0xff]
    %v156 = vld [vmem:[#allocation2 + $0x238] sm:$0xff]
    %v157 = vld [vmem:[#allocation2 + $0x240] sm:$0xff]
    %v158 = vld [vmem:[#allocation2 + $0x248] sm:$0xff]
    %v159 = vld [vmem:[#allocation2 + $0x250] sm:$0xff]
    %v160 = vld [vmem:[#allocation2 + $0x258] sm:$0xff]
    %v161 = vld [vmem:[#allocation2 + $0x260] sm:$0xff]
    %v162 = vld [vmem:[#allocation2 + $0x268] sm:$0xff]
    %v163 = vld [vmem:[#allocation2 + $0x270] sm:$0xff]
    %v164 = vld [vmem:[#allocation2 + $0x278] sm:$0xff]
    %v165 = vld [vmem:[#allocation2 + $0x280] sm:$0xff]
    %v166 = vld [vmem:[#allocation2 + $0x288] sm:$0xff]
    %v167 = vld [vmem:[#allocation2 + $0x290] sm:$0xff]
    %v168 = vld [vmem:[#allocation2 + $0x298] sm:$0xff]
    %v169 = vld [vmem:[#allocation2 + $0x2a0] sm:$0xff]
    %v170 = vld [vmem:[#allocation2 + $0x2a8] sm:$0xff]
    %v171 = vld [vmem:[#allocation2 + $0x2b0] sm:$0xff]
    %v172 = vld [vmem:[#allocation2 + $0x2b8] sm:$0xff]
    %v173 = vld [vmem:[#allocation2 + $0x2c0] sm:$0xff]
    %v174 = vld [vmem:[#allocation2 + $0x2c8] sm:$0xff]
    %v175 = vld [vmem:[#allocation2 + $0x2d0] sm:$0xff]
    %v176 = vld [vmem:[#allocation2 + $0x2d8] sm:$0xff]
    %v177 = vld [vmem:[#allocation2 + $0x2e0] sm:$0xff]
    %v178 = vld [vmem:[#allocation2 + $0x2e8] sm:$0xff]
    %v179 = vld [vmem:[#allocation2 + $0x2f0] sm:$0xff]
    %v180 = vld [vmem:[#allocation2 + $0x2f8] sm:$0xff]
    %v181 = vld [vmem:[#allocation2 + $0x300] sm:$0xff]
    %v182 = vld [vmem:[#allocation2 + $0x308] sm:$0xff]
    %v183 = vld [vmem:[#allocation2 + $0x310] sm:$0xff]
    %v184 = vld [vmem:[#allocation2 + $0x318] sm:$0xff]
    %v185 = vld [vmem:[#allocation2 + $0x320] sm:$0xff]
    %v186 = vld [vmem:[#allocation2 + $0x328] sm:$0xff]
    %v187 = vld [vmem:[#allocation2 + $0x330] sm:$0xff]
    %v188 = vld [vmem:[#allocation2 + $0x338] sm:$0xff]
    %v189 = vld [vmem:[#allocation2 + $0x340] sm:$0xff]
    %v190 = vld [vmem:[#allocation2 + $0x348] sm:$0xff]
    %v191 = vld [vmem:[#allocation2 + $0x350] sm:$0xff]
    %v192 = vld [vmem:[#allocation2 + $0x358] sm:$0xff]
    %v193 = vld [vmem:[#allocation2 + $0x360] sm:$0xff]
    %v194 = vld [vmem:[#allocation2 + $0x368] sm:$0xff]
    %v195 = vld [vmem:[#allocation2 + $0x370] sm:$0xff]
    %v196 = vld [vmem:[#allocation2 + $0x378] sm:$0xff]
    %v197 = vld [vmem:[#allocation2 + $0x380] sm:$0xff]
    %v198 = vld [vmem:[#allocation2 + $0x388] sm:$0xff]
    %v199 = vld [vmem:[#allocation2 + $0x390] sm:$0xff]
    %v200 = vld [vmem:[#allocation2 + $0x398] sm:$0xff]
    %v201 = vld [vmem:[#allocation2 + $0x3a0] sm:$0xff]
    %v202 = vld [vmem:[#allocation2 + $0x3a8] sm:$0xff]
    %v203 = vld [vmem:[#allocation2 + $0x3b0] sm:$0xff]
    %v204 = vld [vmem:[#allocation2 + $0x3b8] sm:$0xff]
    %v205 = vld [vmem:[#allocation2 + $0x3c0] sm:$0xff]
    %v206 = vld [vmem:[#allocation2 + $0x3c8] sm:$0xff]
    %v207 = vld [vmem:[#allocation2 + $0x3d0] sm:$0xff]
    %v208 = vld [vmem:[#allocation2 + $0x3d8] sm:$0xff]
    %v209 = vld [vmem:[#allocation2 + $0x3e0] sm:$0xff]
    %v210 = vld [vmem:[#allocation2 + $0x3e8] sm:$0xff]
    %v211 = vld [vmem:[#allocation2 + $0x3f0] sm:$0xff]
    %v212 = vld [vmem:[#allocation2 + $0x3f8] sm:$0xff]
    %v213 = vld [vmem:[#allocation2 + $0x400] sm:$0xff]
    %v214 = vld [vmem:[#allocation2 + $0x408] sm:$0xff]
    %v215 = vld [vmem:[#allocation2 + $0x410] sm:$0xff]
    %v216 = vld [vmem:[#allocation2 + $0x418] sm:$0xff]
    %v217 = vld [vmem:[#allocation2 + $0x420] sm:$0xff]
    %v218 = vld [vmem:[#allocation2 + $0x428] sm:$0xff]
    %v219 = vld [vmem:[#allocation2 + $0x430] sm:$0xff]
    %v220 = vld [vmem:[#allocation2 + $0x438] sm:$0xff]
    %v221 = vld [vmem:[#allocation2 + $0x440] sm:$0xff]
    %v222 = vld [vmem:[#allocation2 + $0x448] sm:$0xff]
    %v223 = vld [vmem:[#allocation2 + $0x450] sm:$0xff]
    %v224 = vld [vmem:[#allocation2 + $0x458] sm:$0xff]
    %v225 = vld [vmem:[#allocation2 + $0x460] sm:$0xff]
    %v226 = vld [vmem:[#allocation2 + $0x468] sm:$0xff]
    %v227 = vld [vmem:[#allocation2 + $0x470] sm:$0xff]
    %v228 = vld [vmem:[#allocation2 + $0x478] sm:$0xff]
    %v229 = vld [vmem:[#allocation2 + $0x480] sm:$0xff]
    %v230 = vld [vmem:[#allocation2 + $0x488] sm:$0xff]
    %v231 = vld [vmem:[#allocation2 + $0x490] sm:$0xff]
    %v232 = vld [vmem:[#allocation2 + $0x498] sm:$0xff]
    %v233 = vld [vmem:[#allocation2 + $0x4a0] sm:$0xff]
    %v234 = vld [vmem:[#allocation2 + $0x4a8] sm:$0xff]
    %v235 = vld [vmem:[#allocation2 + $0x4b0] sm:$0xff]
    %v236 = vld [vmem:[#allocation2 + $0x4b8] sm:$0xff]
    %v237 = vld [vmem:[#allocation2 + $0x4c0] sm:$0xff]
    %v238 = vld [vmem:[#allocation2 + $0x4c8] sm:$0xff]
    %v239 = vld [vmem:[#allocation2 + $0x4d0] sm:$0xff]
    %v240 = vld [vmem:[#allocation2 + $0x4d8] sm:$0xff]
    %v241 = vld [vmem:[#allocation2 + $0x4e0] sm:$0xff]
    %v242 = vld [vmem:[#allocation2 + $0x4e8] sm:$0xff]
    %v243 = vld [vmem:[#allocation2 + $0x4f0] sm:$0xff]
    %v244 = vld [vmem:[#allocation2 + $0x4f8] sm:$0xff]
    %v245 = vld [vmem:[#allocation2 + $0x500] sm:$0xff]
    %v246 = vld [vmem:[#allocation2 + $0x508] sm:$0xff]
    %v247 = vld [vmem:[#allocation2 + $0x510] sm:$0xff]
    %v248 = vld [vmem:[#allocation2 + $0x518] sm:$0xff]
    %v249 = vld [vmem:[#allocation2 + $0x520] sm:$0xff]
    %v250 = vld [vmem:[#allocation2 + $0x528] sm:$0xff]
    %v251 = vld [vmem:[#allocation2 + $0x530] sm:$0xff]
    %v252 = vld [vmem:[#allocation2 + $0x538] sm:$0xff]
    %v253 = vld [vmem:[#allocation2 + $0x540] sm:$0xff]
    %v254 = vld [vmem:[#allocation2 + $0x548] sm:$0xff]
    %v255 = vld [vmem:[#allocation2 + $0x550] sm:$0xff]
    %v256 = vld [vmem:[#allocation2 + $0x558] sm:$0xff]
    %v257 = vld [vmem:[#allocation2 + $0x560] sm:$0xff]
    %v258 = vld [vmem:[#allocation2 + $0x568] sm:$0xff]
    %v259 = vld [vmem:[#allocation2 + $0x570] sm:$0xff]
    %v260 = vld [vmem:[#allocation2 + $0x578] sm:$0xff]
    %v261 = vld [vmem:[#allocation2 + $0x580] sm:$0xff]
    %v262 = vld [vmem:[#allocation2 + $0x588] sm:$0xff]
    %v263 = vld [vmem:[#allocation2 + $0x590] sm:$0xff]
    %v264 = vld [vmem:[#allocation2 + $0x598] sm:$0xff]
    %v265 = vld [vmem:[#allocation2 + $0x5a0] sm:$0xff]
    %v266 = vld [vmem:[#allocation2 + $0x5a8] sm:$0xff]
    %v267 = vld [vmem:[#allocation2 + $0x5b0] sm:$0xff]
    %v268 = vld [vmem:[#allocation2 + $0x5b8] sm:$0xff]
    %v269 = vld [vmem:[#allocation2 + $0x5c0] sm:$0xff]
    %v270 = vld [vmem:[#allocation2 + $0x5c8] sm:$0xff]
    %v271 = vld [vmem:[#allocation2 + $0x5d0] sm:$0xff]
    %v272 = vld [vmem:[#allocation2 + $0x5d8] sm:$0xff]
    %v273 = vld [vmem:[#allocation2 + $0x5e0] sm:$0xff]
    %v274 = vld [vmem:[#allocation2 + $0x5e8] sm:$0xff]
    %v275 = vld [vmem:[#allocation2 + $0x5f0] sm:$0xff]
    %v276 = vld [vmem:[#allocation2 + $0x5f8] sm:$0xff]
    %v277 = vld [vmem:[#allocation2 + $0x600] sm:$0xff]
    %v278 = vld [vmem:[#allocation2 + $0x608] sm:$0xff]
    %v279 = vld [vmem:[#allocation2 + $0x610] sm:$0xff]
    %v280 = vld [vmem:[#allocation2 + $0x618] sm:$0xff]
    %v281 = vld [vmem:[#allocation2 + $0x620] sm:$0xff]
    %v282 = vld [vmem:[#allocation2 + $0x628] sm:$0xff]
    %v283 = vld [vmem:[#allocation2 + $0x630] sm:$0xff]
    %v284 = vld [vmem:[#allocation2 + $0x638] sm:$0xff]
    %v285 = vld [vmem:[#allocation2 + $0x640] sm:$0xff]
    %v286 = vld [vmem:[#allocation2 + $0x648] sm:$0xff]
    %v287 = vld [vmem:[#allocation2 + $0x650] sm:$0xff]
    %v288 = vld [vmem:[#allocation2 + $0x658] sm:$0xff]
    %v289 = vld [vmem:[#allocation2 + $0x660] sm:$0xff]
    %v290 = vld [vmem:[#allocation2 + $0x668] sm:$0xff]
    %v291 = vld [vmem:[#allocation2 + $0x670] sm:$0xff]
    %v292 = vld [vmem:[#allocation2 + $0x678] sm:$0xff]
    %v293 = vld [vmem:[#allocation2 + $0x680] sm:$0xff]
    %v294 = vld [vmem:[#allocation2 + $0x688] sm:$0xff]
    %v295 = vld [vmem:[#allocation2 + $0x690] sm:$0xff]
    %v296 = vld [vmem:[#allocation2 + $0x698] sm:$0xff]
    %v297 = vld [vmem:[#allocation2 + $0x6a0] sm:$0xff]
    %v298 = vld [vmem:[#allocation2 + $0x6a8] sm:$0xff]
    %v299 = vld [vmem:[#allocation2 + $0x6b0] sm:$0xff]
    %v300 = vld [vmem:[#allocation2 + $0x6b8] sm:$0xff]
    %v301 = vld [vmem:[#allocation2 + $0x6c0] sm:$0xff]
    %v302 = vld [vmem:[#allocation2 + $0x6c8] sm:$0xff]
    %v303 = vld [vmem:[#allocation2 + $0x6d0] sm:$0xff]
    %v304 = vld [vmem:[#allocation2 + $0x6d8] sm:$0xff]
    %v305 = vld [vmem:[#allocation2 + $0x6e0] sm:$0xff]
    %v306 = vld [vmem:[#allocation2 + $0x6e8] sm:$0xff]
    %v307 = vld [vmem:[#allocation2 + $0x6f0] sm:$0xff]
    %v308 = vld [vmem:[#allocation2 + $0x6f8] sm:$0xff]
    %v309 = vld [vmem:[#allocation2 + $0x700] sm:$0xff]
    %v310 = vld [vmem:[#allocation2 + $0x708] sm:$0xff]
    %v311 = vld [vmem:[#allocation2 + $0x710] sm:$0xff]
    %v312 = vld [vmem:[#allocation2 + $0x718] sm:$0xff]
    %v313 = vld [vmem:[#allocation2 + $0x720] sm:$0xff]
    %v314 = vld [vmem:[#allocation2 + $0x728] sm:$0xff]
    %v315 = vld [vmem:[#allocation2 + $0x730] sm:$0xff]
    %v316 = vld [vmem:[#allocation2 + $0x738] sm:$0xff]
    %v317 = vld [vmem:[#allocation2 + $0x740] sm:$0xff]
    %v318 = vld [vmem:[#allocation2 + $0x748] sm:$0xff]
    %v319 = vld [vmem:[#allocation2 + $0x750] sm:$0xff]
    %v320 = vld [vmem:[#allocation2 + $0x758] sm:$0xff]
    %v321 = vld [vmem:[#allocation2 + $0x760] sm:$0xff]
    %v322 = vld [vmem:[#allocation2 + $0x768] sm:$0xff]
    %v323 = vld [vmem:[#allocation2 + $0x770] sm:$0xff]
    %v324 = vld [vmem:[#allocation2 + $0x778] sm:$0xff]
    %v325 = vld [vmem:[#allocation2 + $0x780] sm:$0xff]
    %v326 = vld [vmem:[#allocation2 + $0x788] sm:$0xff]
    %v327 = vld [vmem:[#allocation2 + $0x790] sm:$0xff]
    %v328 = vld [vmem:[#allocation2 + $0x798] sm:$0xff]
    %v329 = vld [vmem:[#allocation2 + $0x7a0] sm:$0xff]
    %v330 = vld [vmem:[#allocation2 + $0x7a8] sm:$0xff]
    %v331 = vld [vmem:[#allocation2 + $0x7b0] sm:$0xff]
    %v332 = vld [vmem:[#allocation2 + $0x7b8] sm:$0xff]
    %v333 = vld [vmem:[#allocation2 + $0x7c0] sm:$0xff]
    %v334 = vld [vmem:[#allocation2 + $0x7c8] sm:$0xff]
    %v335 = vld [vmem:[#allocation2 + $0x7d0] sm:$0xff]
    %v336 = vld [vmem:[#allocation2 + $0x7d8] sm:$0xff]
    %v337 = vld [vmem:[#allocation2 + $0x7e0] sm:$0xff]
    %v338 = vld [vmem:[#allocation2 + $0x7e8] sm:$0xff]
    %v339 = vld [vmem:[#allocation2 + $0x7f0] sm:$0xff]
    %v340 = vld [vmem:[#allocation2 + $0x7f8] sm:$0xff]
    %v341 = vld [vmem:[%s2] sm:$0x3]
    %v343 = vlaneseq
    %v344 = vshrl.u32 %v343, 7
    %v345 = vsub.s32 0, %v344
    %v346 = vrot.slane %v341, %v345
    %v347 = vlaneseq
    %v348 = vshrl.u32 %v347, 7
    %v349 = vsub.s32 1, %v348
    %v350 = vrot.slane %v341, %v349
    %353 = vmatprep.subr.mxu0 %v86
    %354 = vmatpush1.msra.mxu0 %v85
    %355 = vmatprep.subr.mxu0 %v88
    %356 = vmatpush1.msra.mxu0 %v87
    %357 = vmatprep.subr.mxu0 %v90
    %358 = vmatpush1.msra.mxu0 %v89
    %359 = vmatprep.subr.mxu0 %v92
    %360 = vmatpush1.msra.mxu0 %v91
    %361 = vmatprep.subr.mxu0 %v94
    %362 = vmatpush1.msra.mxu0 %v93
    %363 = vmatprep.subr.mxu0 %v96
    %364 = vmatpush1.msra.mxu0 %v95
    %365 = vmatprep.subr.mxu0 %v98
    %366 = vmatpush1.msra.mxu0 %v97
    %367 = vmatprep.subr.mxu0 %v100
    %368 = vmatpush1.msra.mxu0 %v99
    %369 = vmatprep.subr.mxu0 %v102
    %370 = vmatpush1.msra.mxu0 %v101
    %371 = vmatprep.subr.mxu0 %v104
    %372 = vmatpush1.msra.mxu0 %v103
    %373 = vmatprep.subr.mxu0 %v106
    %374 = vmatpush1.msra.mxu0 %v105
    %375 = vmatprep.subr.mxu0 %v108
    %376 = vmatpush1.msra.mxu0 %v107
    %377 = vmatprep.subr.mxu0 %v110
    %378 = vmatpush1.msra.mxu0 %v109
    %379 = vmatprep.subr.mxu0 %v112
    %380 = vmatpush1.msra.mxu0 %v111
    %381 = vmatprep.subr.mxu0 %v114
    %382 = vmatpush1.msra.mxu0 %v113
    %383 = vmatprep.subr.mxu0 %v116
    %384 = vmatpush1.msra.mxu0 %v115
    %385 = vmatprep.subr.mxu0 %v118
    %386 = vmatpush1.msra.mxu0 %v117
    %387 = vmatprep.subr.mxu0 %v120
    %388 = vmatpush1.msra.mxu0 %v119
    %389 = vmatprep.subr.mxu0 %v122
    %390 = vmatpush1.msra.mxu0 %v121
    %391 = vmatprep.subr.mxu0 %v124
    %392 = vmatpush1.msra.mxu0 %v123
    %393 = vmatprep.subr.mxu0 %v126
    %394 = vmatpush1.msra.mxu0 %v125
    %395 = vmatprep.subr.mxu0 %v128
    %396 = vmatpush1.msra.mxu0 %v127
    %397 = vmatprep.subr.mxu0 %v130
    %398 = vmatpush1.msra.mxu0 %v129
    %399 = vmatprep.subr.mxu0 %v132
    %400 = vmatpush1.msra.mxu0 %v131
    %401 = vmatprep.subr.mxu0 %v134
    %402 = vmatpush1.msra.mxu0 %v133
    %403 = vmatprep.subr.mxu0 %v136
    %404 = vmatpush1.msra.mxu0 %v135
    %405 = vmatprep.subr.mxu0 %v138
    %406 = vmatpush1.msra.mxu0 %v137
    %407 = vmatprep.subr.mxu0 %v140
    %408 = vmatpush1.msra.mxu0 %v139
    %409 = vmatprep.subr.mxu0 %v142
    %410 = vmatpush1.msra.mxu0 %v141
    %411 = vmatprep.subr.mxu0 %v144
    %412 = vmatpush1.msra.mxu0 %v143
    %413 = vmatprep.subr.mxu0 %v146
    %414 = vmatpush1.msra.mxu0 %v145
    %415 = vmatprep.subr.mxu0 %v148
    %416 = vmatpush1.msra.mxu0 %v147
    %417 = vmatprep.mubr.f32.mxu0 %v70
    %418 = vmatmul.mubr.f32.gmra.mrb[0].mxu0 %v69
    %v419 = vpop.f32.mrb[0].mxu0
    %v420 = vadd.f32 %v346, %v419
    %v421 = vpop.f32.mrb[0].mxu0
    %v422 = vadd.f32 %v350, %v421
    %423 = vmatprep.mubr.f32.mxu0 %v78
    %424 = vmatmul.mubr.f32.gmra.mrb[0].mxu0 %v77
    %v425 = vpop.f32.mrb[0].mxu0
    %v426 = vadd.f32 %v346, %v425
    %v427 = vpop.f32.mrb[0].mxu0
    %v428 = vadd.f32 %v350, %v427
    %429 = vdwg.mxu0
    %430 = vmatprep.subr.mxu0 %v150
    %431 = vmatpush1.msra.mxu0 %v149
    %432 = vmatprep.subr.mxu0 %v152
    %433 = vmatpush1.msra.mxu0 %v151
    %434 = vmatprep.subr.mxu0 %v154
    %435 = vmatpush1.msra.mxu0 %v153
    %436 = vmatprep.subr.mxu0 %v156
    %437 = vmatpush1.msra.mxu0 %v155
    %438 = vmatprep.subr.mxu0 %v158
    %439 = vmatpush1.msra.mxu0 %v157
    %440 = vmatprep.subr.mxu0 %v160
    %441 = vmatpush1.msra.mxu0 %v159
    %442 = vmatprep.subr.mxu0 %v162
    %443 = vmatpush1.msra.mxu0 %v161
    %444 = vmatprep.subr.mxu0 %v164
    %445 = vmatpush1.msra.mxu0 %v163
    %446 = vmatprep.subr.mxu0 %v166
    %447 = vmatpush1.msra.mxu0 %v165
    %448 = vmatprep.subr.mxu0 %v168
    %449 = vmatpush1.msra.mxu0 %v167
    %450 = vmatprep.subr.mxu0 %v170
    %451 = vmatpush1.msra.mxu0 %v169
    %452 = vmatprep.subr.mxu0 %v172
    %453 = vmatpush1.msra.mxu0 %v171
    %454 = vmatprep.subr.mxu0 %v174
    %455 = vmatpush1.msra.mxu0 %v173
    %456 = vmatprep.subr.mxu0 %v176
    %457 = vmatpush1.msra.mxu0 %v175
    %458 = vmatprep.subr.mxu0 %v178
    %459 = vmatpush1.msra.mxu0 %v177
    %460 = vmatprep.subr.mxu0 %v180
    %461 = vmatpush1.msra.mxu0 %v179
    %462 = vmatprep.subr.mxu0 %v182
    %463 = vmatpush1.msra.mxu0 %v181
    %464 = vmatprep.subr.mxu0 %v184
    %465 = vmatpush1.msra.mxu0 %v183
    %466 = vmatprep.subr.mxu0 %v186
    %467 = vmatpush1.msra.mxu0 %v185
    %468 = vmatprep.subr.mxu0 %v188
    %469 = vmatpush1.msra.mxu0 %v187
    %470 = vmatprep.subr.mxu0 %v190
    %471 = vmatpush1.msra.mxu0 %v189
    %472 = vmatprep.subr.mxu0 %v192
    %473 = vmatpush1.msra.mxu0 %v191
    %474 = vmatprep.subr.mxu0 %v194
    %475 = vmatpush1.msra.mxu0 %v193
    %476 = vmatprep.subr.mxu0 %v196
    %477 = vmatpush1.msra.mxu0 %v195
    %478 = vmatprep.subr.mxu0 %v198
    %479 = vmatpush1.msra.mxu0 %v197
    %480 = vmatprep.subr.mxu0 %v200
    %481 = vmatpush1.msra.mxu0 %v199
    %482 = vmatprep.subr.mxu0 %v202
    %483 = vmatpush1.msra.mxu0 %v201
    %484 = vmatprep.subr.mxu0 %v204
    %485 = vmatpush1.msra.mxu0 %v203
    %486 = vmatprep.subr.mxu0 %v206
    %487 = vmatpush1.msra.mxu0 %v205
    %488 = vmatprep.subr.mxu0 %v208
    %489 = vmatpush1.msra.mxu0 %v207
    %490 = vmatprep.subr.mxu0 %v210
    %491 = vmatpush1.msra.mxu0 %v209
    %492 = vmatprep.subr.mxu0 %v212
    %493 = vmatpush1.msra.mxu0 %v211
    %494 = vmatprep.mubr.f32.mxu0 %v72
    %495 = vmatmul.mubr.f32.gmra.mrb[0].mxu0 %v71
    %v496 = vpop.f32.mrb[0].mxu0
    %v497 = vadd.f32 %v420, %v496
    %v498 = vpop.f32.mrb[0].mxu0
    %v499 = vadd.f32 %v422, %v498
    %500 = vmatprep.mubr.f32.mxu0 %v80
    %501 = vmatmul.mubr.f32.gmra.mrb[0].mxu0 %v79
    %v502 = vpop.f32.mrb[0].mxu0
    %v503 = vadd.f32 %v426, %v502
    %v504 = vpop.f32.mrb[0].mxu0
    %v505 = vadd.f32 %v428, %v504
    %506 = vdwg.mxu0
    %507 = vmatprep.subr.mxu0 %v214
    %508 = vmatpush1.msra.mxu0 %v213
    %509 = vmatprep.subr.mxu0 %v216
    %510 = vmatpush1.msra.mxu0 %v215
    %511 = vmatprep.subr.mxu0 %v218
    %512 = vmatpush1.msra.mxu0 %v217
    %513 = vmatprep.subr.mxu0 %v220
    %514 = vmatpush1.msra.mxu0 %v219
    %515 = vmatprep.subr.mxu0 %v222
    %516 = vmatpush1.msra.mxu0 %v221
    %517 = vmatprep.subr.mxu0 %v224
    %518 = vmatpush1.msra.mxu0 %v223
    %519 = vmatprep.subr.mxu0 %v226
    %520 = vmatpush1.msra.mxu0 %v225
    %521 = vmatprep.subr.mxu0 %v228
    %522 = vmatpush1.msra.mxu0 %v227
    %523 = vmatprep.subr.mxu0 %v230
    %524 = vmatpush1.msra.mxu0 %v229
    %525 = vmatprep.subr.mxu0 %v232
    %526 = vmatpush1.msra.mxu0 %v231
    %527 = vmatprep.subr.mxu0 %v234
    %528 = vmatpush1.msra.mxu0 %v233
    %529 = vmatprep.subr.mxu0 %v236
    %530 = vmatpush1.msra.mxu0 %v235
    %531 = vmatprep.subr.mxu0 %v238
    %532 = vmatpush1.msra.mxu0 %v237
    %533 = vmatprep.subr.mxu0 %v240
    %534 = vmatpush1.msra.mxu0 %v239
    %535 = vmatprep.subr.mxu0 %v242
    %536 = vmatpush1.msra.mxu0 %v241
    %537 = vmatprep.subr.mxu0 %v244
    %538 = vmatpush1.msra.mxu0 %v243
    %539 = vmatprep.subr.mxu0 %v246
    %540 = vmatpush1.msra.mxu0 %v245
    %541 = vmatprep.subr.mxu0 %v248
    %542 = vmatpush1.msra.mxu0 %v247
    %543 = vmatprep.subr.mxu0 %v250
    %544 = vmatpush1.msra.mxu0 %v249
    %545 = vmatprep.subr.mxu0 %v252
    %546 = vmatpush1.msra.mxu0 %v251
    %547 = vmatprep.subr.mxu0 %v254
    %548 = vmatpush1.msra.mxu0 %v253
    %549 = vmatprep.subr.mxu0 %v256
    %550 = vmatpush1.msra.mxu0 %v255
    %551 = vmatprep.subr.mxu0 %v258
    %552 = vmatpush1.msra.mxu0 %v257
    %553 = vmatprep.subr.mxu0 %v260
    %554 = vmatpush1.msra.mxu0 %v259
    %555 = vmatprep.subr.mxu0 %v262
    %556 = vmatpush1.msra.mxu0 %v261
    %557 = vmatprep.subr.mxu0 %v264
    %558 = vmatpush1.msra.mxu0 %v263
    %559 = vmatprep.subr.mxu0 %v266
    %560 = vmatpush1.msra.mxu0 %v265
    %561 = vmatprep.subr.mxu0 %v268
    %562 = vmatpush1.msra.mxu0 %v267
    %563 = vmatprep.subr.mxu0 %v270
    %564 = vmatpush1.msra.mxu0 %v269
    %565 = vmatprep.subr.mxu0 %v272
    %566 = vmatpush1.msra.mxu0 %v271
    %567 = vmatprep.subr.mxu0 %v274
    %568 = vmatpush1.msra.mxu0 %v273
    %569 = vmatprep.subr.mxu0 %v276
    %570 = vmatpush1.msra.mxu0 %v275
    %571 = vmatprep.mubr.f32.mxu0 %v74
    %572 = vmatmul.mubr.f32.gmra.mrb[0].mxu0 %v73
    %v573 = vpop.f32.mrb[0].mxu0
    %v574 = vadd.f32 %v497, %v573
    %v575 = vpop.f32.mrb[0].mxu0
    %v576 = vadd.f32 %v499, %v575
    %577 = vmatprep.mubr.f32.mxu0 %v82
    %578 = vmatmul.mubr.f32.gmra.mrb[0].mxu0 %v81
    %v579 = vpop.f32.mrb[0].mxu0
    %v580 = vadd.f32 %v503, %v579
    %v581 = vpop.f32.mrb[0].mxu0
    %v582 = vadd.f32 %v505, %v581
    %583 = vdwg.mxu0
    %584 = vmatprep.subr.mxu0 %v278
    %585 = vmatpush1.msra.mxu0 %v277
    %586 = vmatprep.subr.mxu0 %v280
    %587 = vmatpush1.msra.mxu0 %v279
    %588 = vmatprep.subr.mxu0 %v282
    %589 = vmatpush1.msra.mxu0 %v281
    %590 = vmatprep.subr.mxu0 %v284
    %591 = vmatpush1.msra.mxu0 %v283
    %592 = vmatprep.subr.mxu0 %v286
    %593 = vmatpush1.msra.mxu0 %v285
    %594 = vmatprep.subr.mxu0 %v288
    %595 = vmatpush1.msra.mxu0 %v287
    %596 = vmatprep.subr.mxu0 %v290
    %597 = vmatpush1.msra.mxu0 %v289
    %598 = vmatprep.subr.mxu0 %v292
    %599 = vmatpush1.msra.mxu0 %v291
    %600 = vmatprep.subr.mxu0 %v294
    %601 = vmatpush1.msra.mxu0 %v293
    %602 = vmatprep.subr.mxu0 %v296
    %603 = vmatpush1.msra.mxu0 %v295
    %604 = vmatprep.subr.mxu0 %v298
    %605 = vmatpush1.msra.mxu0 %v297
    %606 = vmatprep.subr.mxu0 %v300
    %607 = vmatpush1.msra.mxu0 %v299
    %608 = vmatprep.subr.mxu0 %v302
    %609 = vmatpush1.msra.mxu0 %v301
    %610 = vmatprep.subr.mxu0 %v304
    %611 = vmatpush1.msra.mxu0 %v303
    %612 = vmatprep.subr.mxu0 %v306
    %613 = vmatpush1.msra.mxu0 %v305
    %614 = vmatprep.subr.mxu0 %v308
    %615 = vmatpush1.msra.mxu0 %v307
    %616 = vmatprep.subr.mxu0 %v310
    %617 = vmatpush1.msra.mxu0 %v309
    %618 = vmatprep.subr.mxu0 %v312
    %619 = vmatpush1.msra.mxu0 %v311
    %620 = vmatprep.subr.mxu0 %v314
    %621 = vmatpush1.msra.mxu0 %v313
    %622 = vmatprep.subr.mxu0 %v316
    %623 = vmatpush1.msra.mxu0 %v315
    %624 = vmatprep.subr.mxu0 %v318
    %625 = vmatpush1.msra.mxu0 %v317
    %626 = vmatprep.subr.mxu0 %v320
    %627 = vmatpush1.msra.mxu0 %v319
    %628 = vmatprep.subr.mxu0 %v322
    %629 = vmatpush1.msra.mxu0 %v321
    %630 = vmatprep.subr.mxu0 %v324
    %631 = vmatpush1.msra.mxu0 %v323
    %632 = vmatprep.subr.mxu0 %v326
    %633 = vmatpush1.msra.mxu0 %v325
    %634 = vmatprep.subr.mxu0 %v328
    %635 = vmatpush1.msra.mxu0 %v327
    %636 = vmatprep.subr.mxu0 %v330
    %637 = vmatpush1.msra.mxu0 %v329
    %638 = vmatprep.subr.mxu0 %v332
    %639 = vmatpush1.msra.mxu0 %v331
    %640 = vmatprep.subr.mxu0 %v334
    %641 = vmatpush1.msra.mxu0 %v333
    %642 = vmatprep.subr.mxu0 %v336
    %643 = vmatpush1.msra.mxu0 %v335
    %644 = vmatprep.subr.mxu0 %v338
    %645 = vmatpush1.msra.mxu0 %v337
    %646 = vmatprep.subr.mxu0 %v340
    %647 = vmatpush1.msra.mxu0 %v339
    %648 = vmatprep.mubr.f32.mxu0 %v76
    %649 = vmatmul.mubr.f32.gmra.mrb[0].mxu0 %v75
    %v650 = vpop.f32.mrb[0].mxu0
    %v651 = vadd.f32 %v574, %v650
    %v652 = vpop.f32.mrb[0].mxu0
    %v653 = vadd.f32 %v576, %v652
    %654 = vmatprep.mubr.f32.mxu0 %v84
    %655 = vmatmul.mubr.f32.gmra.mrb[0].mxu0 %v83
    %v656 = vpop.f32.mrb[0].mxu0
    %v657 = vadd.f32 %v580, %v656
    %v658 = vpop.f32.mrb[0].mxu0
    %v659 = vadd.f32 %v582, %v658
    %660 = vdwg.mxu0
    %v661 = vmax.f32 %v651, 0.0
    %v662 = vmax.f32 %v653, 0.0
    %v663 = vmax.f32 %v657, 0.0
    %v664 = vmax.f32 %v659, 0.0
    %v665 = vld [vmem:[%s3] sm:$0xff]
    %v666 = vld [vmem:[%s3 + $0x8] sm:$0xff]
    %v667 = vld [vmem:[%s3 + $0x10] sm:$0xff]
    %v668 = vld [vmem:[%s3 + $0x18] sm:$0xff]
    %v669 = vld [vmem:[%s3 + $0x20] sm:$0xff]
    %v670 = vld [vmem:[%s3 + $0x28] sm:$0xff]
    %v671 = vld [vmem:[%s3 + $0x30] sm:$0xff]
    %v672 = vld [vmem:[%s3 + $0x38] sm:$0xff]
    %v673 = vld [vmem:[%s3 + $0x40] sm:$0xff]
    %v674 = vld [vmem:[%s3 + $0x48] sm:$0xff]
    %v675 = vld [vmem:[%s3 + $0x50] sm:$0xff]
    %v676 = vld [vmem:[%s3 + $0x58] sm:$0xff]
    %v677 = vld [vmem:[%s3 + $0x60] sm:$0xff]
    %v678 = vld [vmem:[%s3 + $0x68] sm:$0xff]
    %v679 = vld [vmem:[%s3 + $0x70] sm:$0xff]
    %v680 = vld [vmem:[%s3 + $0x78] sm:$0xff]
    %v681 = vld [vmem:[%s3 + $0x80] sm:$0xff]
    %v682 = vld [vmem:[%s3 + $0x88] sm:$0xff]
    %v683 = vld [vmem:[%s3 + $0x90] sm:$0xff]
    %v684 = vld [vmem:[%s3 + $0x98] sm:$0xff]
    %v685 = vld [vmem:[%s3 + $0xa0] sm:$0xff]
    %v686 = vld [vmem:[%s3 + $0xa8] sm:$0xff]
    %v687 = vld [vmem:[%s3 + $0xb0] sm:$0xff]
    %v688 = vld [vmem:[%s3 + $0xb8] sm:$0xff]
    %v689 = vld [vmem:[%s3 + $0xc0] sm:$0xff]
    %v690 = vld [vmem:[%s3 + $0xc8] sm:$0xff]
    %v691 = vld [vmem:[%s3 + $0xd0] sm:$0xff]
    %v692 = vld [vmem:[%s3 + $0xd8] sm:$0xff]
    %v693 = vld [vmem:[%s3 + $0xe0] sm:$0xff]
    %v694 = vld [vmem:[%s3 + $0xe8] sm:$0xff]
    %v695 = vld [vmem:[%s3 + $0xf0] sm:$0xff]
    %v696 = vld [vmem:[%s3 + $0xf8] sm:$0xff]
    %v697 = vld [vmem:[%s4] sm:$0x1]
    %v699 = vlaneseq
    %v700 = vshrl.u32 %v699, 7
    %v701 = vsub.s32 0, %v700
    %v702 = vrot.slane %v697, %v701
    %704 = vmatprep.subr.mxu0 0.0
    %705 = vmatpush1.msra.mxu0 %v665
    %706 = vmatprep.subr.mxu0 0.0
    %707 = vmatpush1.msra.mxu0 %v666
    %708 = vmatprep.subr.mxu0 0.0
    %709 = vmatpush1.msra.mxu0 %v667
    %710 = vmatprep.subr.mxu0 0.0
    %711 = vmatpush1.msra.mxu0 %v668
    %712 = vmatprep.subr.mxu0 0.0
    %713 = vmatpush1.msra.mxu0 %v669
    %714 = vmatprep.subr.mxu0 0.0
    %715 = vmatpush1.msra.mxu0 %v670
    %716 = vmatprep.subr.mxu0 0.0
    %717 = vmatpush1.msra.mxu0 %v671
    %718 = vmatprep.subr.mxu0 0.0
    %719 = vmatpush1.msra.mxu0 %v672
    %720 = vmatprep.subr.mxu0 0.0
    %721 = vmatpush1.msra.mxu0 %v673
    %722 = vmatprep.subr.mxu0 0.0
    %723 = vmatpush1.msra.mxu0 %v674
    %724 = vmatprep.subr.mxu0 0.0
    %725 = vmatpush1.msra.mxu0 %v675
    %726 = vmatprep.subr.mxu0 0.0
    %727 = vmatpush1.msra.mxu0 %v676
    %728 = vmatprep.subr.mxu0 0.0
    %729 = vmatpush1.msra.mxu0 %v677
    %730 = vmatprep.subr.mxu0 0.0
    %731 = vmatpush1.msra.mxu0 %v678
    %732 = vmatprep.subr.mxu0 0.0
    %733 = vmatpush1.msra.mxu0 %v679
    %734 = vmatprep.subr.mxu0 0.0
    %735 = vmatpush1.msra.mxu0 %v680
    %736 = vmatprep.subr.mxu0 0.0
    %737 = vmatpush1.msra.mxu0 %v681
    %738 = vmatprep.subr.mxu0 0.0
    %739 = vmatpush1.msra.mxu0 %v682
    %740 = vmatprep.subr.mxu0 0.0
    %741 = vmatpush1.msra.mxu0 %v683
    %742 = vmatprep.subr.mxu0 0.0
    %743 = vmatpush1.msra.mxu0 %v684
    %744 = vmatprep.subr.mxu0 0.0
    %745 = vmatpush1.msra.mxu0 %v685
    %746 = vmatprep.subr.mxu0 0.0
    %747 = vmatpush1.msra.mxu0 %v686
    %748 = vmatprep.subr.mxu0 0.0
    %749 = vmatpush1.msra.mxu0 %v687
    %750 = vmatprep.subr.mxu0 0.0
    %751 = vmatpush1.msra.mxu0 %v688
    %752 = vmatprep.subr.mxu0 0.0
    %753 = vmatpush1.msra.mxu0 %v689
    %754 = vmatprep.subr.mxu0 0.0
    %755 = vmatpush1.msra.mxu0 %v690
    %756 = vmatprep.subr.mxu0 0.0
    %757 = vmatpush1.msra.mxu0 %v691
    %758 = vmatprep.subr.mxu0 0.0
    %759 = vmatpush1.msra.mxu0 %v692
    %760 = vmatprep.subr.mxu0 0.0
    %761 = vmatpush1.msra.mxu0 %v693
    %762 = vmatprep.subr.mxu0 0.0
    %763 = vmatpush1.msra.mxu0 %v694
    %764 = vmatprep.subr.mxu0 0.0
    %765 = vmatpush1.msra.mxu0 %v695
    %766 = vmatprep.subr.mxu0 0.0
    %767 = vmatpush1.msra.mxu0 %v696
    %768 = vmatprep.mubr.f32.mxu0 %v662
    %769 = vmatmul.mubr.f32.gmra.mrb[0].mxu0 %v661
    %v770 = vpop.f32.mrb[0].mxu0
    %v771 = vadd.f32 %v702, %v770
    %v772 = vpop.f32.mrb[0].mxu0
    %773 = vmatprep.mubr.f32.mxu0 %v664
    %774 = vmatmul.mubr.f32.gmra.mrb[0].mxu0 %v663
    %v775 = vpop.f32.mrb[0].mxu0
    %v776 = vadd.f32 %v702, %v775
    %v777 = vpop.f32.mrb[0].mxu0
    %778 = vdwg.mxu0
    %v779 = vmax.f32 %v771, 0.0
    %v780 = vmax.f32 %v776, 0.0
    %v781 = vld [vmem:[#allocation4] sm:$0xff]
    %v782 = vld [vmem:[#allocation4 + $0x8] sm:$0xff]
    %v783 = vld [vmem:[#allocation4 + $0x10] sm:$0xff]
    %v784 = vld [vmem:[#allocation4 + $0x18] sm:$0xff]
    %v785 = vld [vmem:[#allocation4 + $0x20] sm:$0xff]
    %v786 = vld [vmem:[#allocation4 + $0x28] sm:$0xff]
    %v787 = vld [vmem:[#allocation4 + $0x30] sm:$0xff]
    %v788 = vld [vmem:[#allocation4 + $0x38] sm:$0xff]
    %v789 = vld [vmem:[%s6] sm:$0x1]
    %v791 = vlaneseq
    %v792 = vshrl.u32 %v791, 7
    %v793 = vsub.s32 0, %v792
    %v794 = vrot.slane %v789, %v793
    %vm796 = vcmask 523264
    %v798 = vsel %vm796, %v779, 0
    %v801 = vsel %vm796, %v780, 0
    %803 = vmatprep.subr.mxu0 0.0
    %804 = vmatpush1.msra.mxu0 %v781
    %805 = vmatprep.subr.mxu0 0.0
    %806 = vmatpush1.msra.mxu0 %v782
    %807 = vmatprep.subr.mxu0 0.0
    %808 = vmatpush1.msra.mxu0 %v783
    %809 = vmatprep.subr.mxu0 0.0
    %810 = vmatpush1.msra.mxu0 %v784
    %811 = vmatprep.subr.mxu0 0.0
    %812 = vmatpush1.msra.mxu0 %v785
    %813 = vmatprep.subr.mxu0 0.0
    %814 = vmatpush1.msra.mxu0 %v786
    %815 = vmatprep.subr.mxu0 0.0
    %816 = vmatpush1.msra.mxu0 %v787
    %817 = vmatprep.subr.mxu0 0.0
    %818 = vmatpush1.msra.mxu0 %v788
    %819 = vmatprep.subr.mxu0 0.0
    %820 = vmatpush1.msra.mxu0 0.0
    %821 = vmatprep.subr.mxu0 0.0
    %822 = vmatpush1.msra.mxu0 0.0
    %823 = vmatprep.subr.mxu0 0.0
    %824 = vmatpush1.msra.mxu0 0.0
    %825 = vmatprep.subr.mxu0 0.0
    %826 = vmatpush1.msra.mxu0 0.0
    %827 = vmatprep.subr.mxu0 0.0
    %828 = vmatpush1.msra.mxu0 0.0
    %829 = vmatprep.subr.mxu0 0.0
    %830 = vmatpush1.msra.mxu0 0.0
    %831 = vmatprep.subr.mxu0 0.0
    %832 = vmatpush1.msra.mxu0 0.0
    %833 = vmatprep.subr.mxu0 0.0
    %834 = vmatpush1.msra.mxu0 0.0
    %835 = vmatprep.subr.mxu0 0.0
    %836 = vmatpush1.msra.mxu0 0.0
    %837 = vmatprep.subr.mxu0 0.0
    %838 = vmatpush1.msra.mxu0 0.0
    %839 = vmatprep.subr.mxu0 0.0
    %840 = vmatpush1.msra.mxu0 0.0
    %841 = vmatprep.subr.mxu0 0.0
    %842 = vmatpush1.msra.mxu0 0.0
    %843 = vmatprep.subr.mxu0 0.0
    %844 = vmatpush1.msra.mxu0 0.0
    %845 = vmatprep.subr.mxu0 0.0
    %846 = vmatpush1.msra.mxu0 0.0
    %847 = vmatprep.subr.mxu0 0.0
    %848 = vmatpush1.msra.mxu0 0.0
    %849 = vmatprep.subr.mxu0 0.0
    %850 = vmatpush1.msra.mxu0 0.0
    %851 = vmatprep.subr.mxu0 0.0
    %852 = vmatpush1.msra.mxu0 0.0
    %853 = vmatprep.subr.mxu0 0.0
    %854 = vmatpush1.msra.mxu0 0.0
    %855 = vmatprep.subr.mxu0 0.0
    %856 = vmatpush1.msra.mxu0 0.0
    %857 = vmatprep.subr.mxu0 0.0
    %858 = vmatpush1.msra.mxu0 0.0
    %859 = vmatprep.subr.mxu0 0.0
    %860 = vmatpush1.msra.mxu0 0.0
    %861 = vmatprep.subr.mxu0 0.0
    %862 = vmatpush1.msra.mxu0 0.0
    %863 = vmatprep.subr.mxu0 0.0
    %864 = vmatpush1.msra.mxu0 0.0
    %865 = vmatprep.subr.mxu0 0.0
    %866 = vmatpush1.msra.mxu0 0.0
    %867 = vmatprep.mubr.f32.mxu0 0.0
    %868 = vmatmul.mubr.f32.gmra.mrb[0].mxu0 %v798
    %v869 = vpop.f32.mrb[0].mxu0
    %v870 = vadd.f32 %v794, %v869
    %v871 = vpop.f32.mrb[0].mxu0
    %872 = vmatprep.mubr.f32.mxu0 0.0
    %873 = vmatmul.mubr.f32.gmra.mrb[0].mxu0 %v801
    %v874 = vpop.f32.mrb[0].mxu0
    %v875 = vadd.f32 %v794, %v874
    %v876 = vpop.f32.mrb[0].mxu0
    %877 = vdwg.mxu0
    %v878 = vmax.f32 %v870, 0.0
    %v879 = vmax.f32 %v875, 0.0
    %v880 = vld [vmem:[%s10] sm:$0xff]
    %v881 = vld [vmem:[%s10 + $0x8] sm:$0xf]
    %v882 = vld [vmem:[%s11] sm:$0xff]
    %v883 = vld [vmem:[%s11 + $0x8] sm:$0xf]
    %885 = vset.pattern.permute.xlu0 0
    %886 = vperm.xlu0 %885, %v880
    %v887 = vpop.permute.xlu0 %886
    %890 = vset.pattern.permute.xlu0 0
    %891 = vperm.xlu0 %890, %v881
    %v892 = vpop.permute.xlu0 %891
    %v894 = vmul.f32 %v887, %v878
    %v895 = vmul.f32 %v892, %v879
    %896 = vset.pattern.permute.xlu0 1
    %897 = vperm.xlu0 %896, %v880
    %v898 = vpop.permute.xlu0 %897
    %900 = vset.pattern.permute.xlu0 1
    %901 = vperm.xlu0 %900, %v881
    %v902 = vpop.permute.xlu0 %901
    %v904 = vmul.f32 %v898, %v878
    %v905 = vmul.f32 %v902, %v879
    %908 = vrot.lane.b32.xlu0 %v904, 124
    %v909 = vpop.permute.xlu0 %908
    %910 = vrot.lane.b32.xlu0 %v905, 124
    %v911 = vpop.permute.xlu0 %910
    %v914 = vadd.f32 %v894, %v909
    %v915 = vadd.f32 %v895, %v911
    %916 = vset.pattern.permute.xlu0 2
    %917 = vperm.xlu0 %916, %v880
    %v918 = vpop.permute.xlu0 %917
    %920 = vset.pattern.permute.xlu0 2
    %921 = vperm.xlu0 %920, %v881
    %v922 = vpop.permute.xlu0 %921
    %v924 = vmul.f32 %v918, %v878
    %v925 = vmul.f32 %v922, %v879
    %928 = vrot.lane.b32.xlu0 %v924, 120
    %v929 = vpop.permute.xlu0 %928
    %930 = vrot.lane.b32.xlu0 %v925, 120
    %v931 = vpop.permute.xlu0 %930
    %v934 = vadd.f32 %v914, %v929
    %v935 = vadd.f32 %v915, %v931
    %936 = vset.pattern.permute.xlu0 3
    %937 = vperm.xlu0 %936, %v880
    %v938 = vpop.permute.xlu0 %937
    %940 = vset.pattern.permute.xlu0 3
    %941 = vperm.xlu0 %940, %v881
    %v942 = vpop.permute.xlu0 %941
    %v944 = vmul.f32 %v938, %v878
    %v945 = vmul.f32 %v942, %v879
    %948 = vrot.lane.b32.xlu0 %v944, 116
    %v949 = vpop.permute.xlu0 %948
    %950 = vrot.lane.b32.xlu0 %v945, 116
    %v951 = vpop.permute.xlu0 %950
    %v954 = vadd.f32 %v934, %v949
    %v955 = vadd.f32 %v935, %v951
    %957 = vset.pattern.permute.xlu0 0
    %958 = vperm.xlu0 %957, %v882
    %v959 = vpop.permute.xlu0 %958
    %962 = vset.pattern.permute.xlu0 0
    %963 = vperm.xlu0 %962, %v883
    %v964 = vpop.permute.xlu0 %963
    %v966 = vadd.f32 %v954, %v959
    %v967 = vadd.f32 %v955, %v964
    %v968 = vmax.f32 %v966, 0.0
    %v969 = vmax.f32 %v967, 0.0
    %v970 = vld [vmem:[%s10 + $0xc] sm:$0xff]
    %v971 = vld [vmem:[%s10 + $0x14] sm:$0xf]
    %v972 = vld [vmem:[%s11 + $0xc] sm:$0xff]
    %v973 = vld [vmem:[%s11 + $0x14] sm:$0xf]
    %975 = vset.pattern.permute.xlu0 0
    %976 = vperm.xlu0 %975, %v970
    %v977 = vpop.permute.xlu0 %976
    %980 = vset.pattern.permute.xlu0 0
    %981 = vperm.xlu0 %980, %v971
    %v982 = vpop.permute.xlu0 %981
    %v984 = vmul.f32 %v977, %v779
    %v985 = vmul.f32 %v982, %v780
    %986 = vset.pattern.permute.xlu0 1
    %987 = vperm.xlu0 %986, %v970
    %v988 = vpop.permute.xlu0 %987
    %990 = vset.pattern.permute.xlu0 1
    %991 = vperm.xlu0 %990, %v971
    %v992 = vpop.permute.xlu0 %991
    %v994 = vmul.f32 %v988, %v779
    %v995 = vmul.f32 %v992, %v780
    %998 = vrot.lane.b32.xlu0 %v994, 112
    %v999 = vpop.permute.xlu0 %998
    %1000 = vrot.lane.b32.xlu0 %v995, 112
    %v1001 = vpop.permute.xlu0 %1000
    %v1004 = vadd.f32 %v984, %v999
    %v1005 = vadd.f32 %v985, %v1001
    %1006 = vset.pattern.permute.xlu0 2
    %1007 = vperm.xlu0 %1006, %v970
    %v1008 = vpop.permute.xlu0 %1007
    %1010 = vset.pattern.permute.xlu0 2
    %1011 = vperm.xlu0 %1010, %v971
    %v1012 = vpop.permute.xlu0 %1011
    %v1014 = vmul.f32 %v1008, %v779
    %v1015 = vmul.f32 %v1012, %v780
    %1018 = vrot.lane.b32.xlu0 %v1014, 96
    %v1019 = vpop.permute.xlu0 %1018
    %1020 = vrot.lane.b32.xlu0 %v1015, 96
    %v1021 = vpop.permute.xlu0 %1020
    %v1024 = vadd.f32 %v1004, %v1019
    %v1025 = vadd.f32 %v1005, %v1021
    %1026 = vset.pattern.permute.xlu0 3
    %1027 = vperm.xlu0 %1026, %v970
    %v1028 = vpop.permute.xlu0 %1027
    %1030 = vset.pattern.permute.xlu0 3
    %1031 = vperm.xlu0 %1030, %v971
    %v1032 = vpop.permute.xlu0 %1031
    %v1034 = vmul.f32 %v1028, %v779
    %v1035 = vmul.f32 %v1032, %v780
    %1038 = vrot.lane.b32.xlu0 %v1034, 80
    %v1039 = vpop.permute.xlu0 %1038
    %1040 = vrot.lane.b32.xlu0 %v1035, 80
    %v1041 = vpop.permute.xlu0 %1040
    %v1044 = vadd.f32 %v1024, %v1039
    %v1045 = vadd.f32 %v1025, %v1041
    %1047 = vset.pattern.permute.xlu0 0
    %1048 = vperm.xlu0 %1047, %v972
    %v1049 = vpop.permute.xlu0 %1048
    %1052 = vset.pattern.permute.xlu0 0
    %1053 = vperm.xlu0 %1052, %v973
    %v1054 = vpop.permute.xlu0 %1053
    %v1056 = vadd.f32 %v1044, %v1049
    %v1057 = vadd.f32 %v1045, %v1054
    %v1058 = vmax.f32 %v1056, 0.0
    %v1059 = vmax.f32 %v1057, 0.0
    %v1060 = vld [vmem:[%s7] sm:$0xf]
    %vm1061 = vcmask 31744
    %v1063 = vsel %vm1061, %v968, 0
    %v1066 = vsel %vm1061, %v969, 0
    %vm1068 = vcmask 1043456
    %v1070 = vsel %vm1068, %v1060, 0
    %1072 = vmatprep.subr.mxu0 0.0
    %1073 = vmatpush1.msra.mxu0 %v1070
    %1074 = vmatprep.subr.mxu0 0.0
    %1075 = vmatpush1.msra.mxu0 0.0
    %1076 = vmatprep.subr.mxu0 0.0
    %1077 = vmatpush1.msra.mxu0 0.0
    %1078 = vmatprep.subr.mxu0 0.0
    %1079 = vmatpush1.msra.mxu0 0.0
    %1080 = vmatprep.subr.mxu0 0.0
    %1081 = vmatpush1.msra.mxu0 0.0
    %1082 = vmatprep.subr.mxu0 0.0
    %1083 = vmatpush1.msra.mxu0 0.0
    %1084 = vmatprep.subr.mxu0 0.0
    %1085 = vmatpush1.msra.mxu0 0.0
    %1086 = vmatprep.subr.mxu0 0.0
    %1087 = vmatpush1.msra.mxu0 0.0
    %1088 = vmatprep.subr.mxu0 0.0
    %1089 = vmatpush1.msra.mxu0 0.0
    %1090 = vmatprep.subr.mxu0 0.0
    %1091 = vmatpush1.msra.mxu0 0.0
    %1092 = vmatprep.subr.mxu0 0.0
    %1093 = vmatpush1.msra.mxu0 0.0
    %1094 = vmatprep.subr.mxu0 0.0
    %1095 = vmatpush1.msra.mxu0 0.0
    %1096 = vmatprep.subr.mxu0 0.0
    %1097 = vmatpush1.msra.mxu0 0.0
    %1098 = vmatprep.subr.mxu0 0.0
    %1099 = vmatpush1.msra.mxu0 0.0
    %1100 = vmatprep.subr.mxu0 0.0
    %1101 = vmatpush1.msra.mxu0 0.0
    %1102 = vmatprep.subr.mxu0 0.0
    %1103 = vmatpush1.msra.mxu0 0.0
    %1104 = vmatprep.subr.mxu0 0.0
    %1105 = vmatpush1.msra.mxu0 0.0
    %1106 = vmatprep.subr.mxu0 0.0
    %1107 = vmatpush1.msra.mxu0 0.0
    %1108 = vmatprep.subr.mxu0 0.0
    %1109 = vmatpush1.msra.mxu0 0.0
    %1110 = vmatprep.subr.mxu0 0.0
    %1111 = vmatpush1.msra.mxu0 0.0
    %1112 = vmatprep.subr.mxu0 0.0
    %1113 = vmatpush1.msra.mxu0 0.0
    %1114 = vmatprep.subr.mxu0 0.0
    %1115 = vmatpush1.msra.mxu0 0.0
    %1116 = vmatprep.subr.mxu0 0.0
    %1117 = vmatpush1.msra.mxu0 0.0
    %1118 = vmatprep.subr.mxu0 0.0
    %1119 = vmatpush1.msra.mxu0 0.0
    %1120 = vmatprep.subr.mxu0 0.0
    %1121 = vmatpush1.msra.mxu0 0.0
    %1122 = vmatprep.subr.mxu0 0.0
    %1123 = vmatpush1.msra.mxu0 0.0
    %1124 = vmatprep.subr.mxu0 0.0
    %1125 = vmatpush1.msra.mxu0 0.0
    %1126 = vmatprep.subr.mxu0 0.0
    %1127 = vmatpush1.msra.mxu0 0.0
    %1128 = vmatprep.subr.mxu0 0.0
    %1129 = vmatpush1.msra.mxu0 0.0
    %1130 = vmatprep.subr.mxu0 0.0
    %1131 = vmatpush1.msra.mxu0 0.0
    %1132 = vmatprep.subr.mxu0 0.0
    %1133 = vmatpush1.msra.mxu0 0.0
    %1134 = vmatprep.subr.mxu0 0.0
    %1135 = vmatpush1.msra.mxu0 0.0
    %1136 = vmatprep.mubr.f32.mxu0 0.0
    %1137 = vmatmul.mubr.f32.gmra.mrb[0].mxu0 %v1063
    %v1138 = vpop.f32.mrb[0].mxu0
    %v1139 = vadd.f32 0.0, %v1138
    %v1140 = vpop.f32.mrb[0].mxu0
    %1141 = vmatprep.mubr.f32.mxu0 0.0
    %1142 = vmatmul.mubr.f32.gmra.mrb[0].mxu0 %v1066
    %v1143 = vpop.f32.mrb[0].mxu0
    %v1144 = vadd.f32 0.0, %v1143
    %v1145 = vpop.f32.mrb[0].mxu0
    %1146 = vdwg.mxu0
    %v1147 = vadd.f32 %v1058, %v1139
    %v1148 = vadd.f32 %v1059, %v1144
    %v1149 = vld [vmem:[%s10 + $0x18] sm:$0xff]
    %v1150 = vld [vmem:[%s10 + $0x20] sm:$0xf]
    %v1151 = vld [vmem:[%s11 + $0x18] sm:$0xff]
    %v1152 = vld [vmem:[%s11 + $0x20] sm:$0xf]
    %1154 = vset.pattern.permute.xlu0 0
    %1155 = vperm.xlu0 %1154, %v1149
    %v1156 = vpop.permute.xlu0 %1155
    %1159 = vset.pattern.permute.xlu0 0
    %1160 = vperm.xlu0 %1159, %v1150
    %v1161 = vpop.permute.xlu0 %1160
    %v1163 = vmul.f32 %v1156, %v661
    %v1164 = vmul.f32 %v1161, %v663
    %1165 = vset.pattern.permute.xlu0 1
    %1166 = vperm.xlu0 %1165, %v1149
    %v1167 = vpop.permute.xlu0 %1166
    %1169 = vset.pattern.permute.xlu0 1
    %1170 = vperm.xlu0 %1169, %v1150
    %v1171 = vpop.permute.xlu0 %1170
    %v1173 = vmul.f32 %v1167, %v661
    %v1174 = vmul.f32 %v1171, %v663
    %1177 = vrot.lane.b32.xlu0 %v1173, 64
    %v1178 = vpop.permute.xlu0 %1177
    %1179 = vrot.lane.b32.xlu0 %v1174, 64
    %v1180 = vpop.permute.xlu0 %1179
    %v1183 = vadd.f32 %v1163, %v1178
    %v1184 = vadd.f32 %v1164, %v1180
    %1185 = vset.pattern.permute.xlu0 2
    %1186 = vperm.xlu0 %1185, %v1149
    %v1187 = vpop.permute.xlu0 %1186
    %1189 = vset.pattern.permute.xlu0 2
    %1190 = vperm.xlu0 %1189, %v1150
    %v1191 = vpop.permute.xlu0 %1190
    %v1193 = vmul.f32 %v1187, %v662
    %v1194 = vmul.f32 %v1191, %v664
    %v1195 = vadd.f32 %v1183, %v1193
    %v1196 = vadd.f32 %v1184, %v1194
    %1197 = vset.pattern.permute.xlu0 3
    %1198 = vperm.xlu0 %1197, %v1149
    %v1199 = vpop.permute.xlu0 %1198
    %1201 = vset.pattern.permute.xlu0 3
    %1202 = vperm.xlu0 %1201, %v1150
    %v1203 = vpop.permute.xlu0 %1202
    %v1205 = vmul.f32 %v1199, %v662
    %v1206 = vmul.f32 %v1203, %v664
    %1209 = vrot.lane.b32.xlu0 %v1205, 64
    %v1210 = vpop.permute.xlu0 %1209
    %1211 = vrot.lane.b32.xlu0 %v1206, 64
    %v1212 = vpop.permute.xlu0 %1211
    %v1215 = vadd.f32 %v1195, %v1210
    %v1216 = vadd.f32 %v1196, %v1212
    %1218 = vset.pattern.permute.xlu0 0
    %1219 = vperm.xlu0 %1218, %v1151
    %v1220 = vpop.permute.xlu0 %1219
    %1223 = vset.pattern.permute.xlu0 0
    %1224 = vperm.xlu0 %1223, %v1152
    %v1225 = vpop.permute.xlu0 %1224
    %v1227 = vadd.f32 %v1215, %v1220
    %v1228 = vadd.f32 %v1216, %v1225
    %v1229 = vmax.f32 %v1227, 0.0
    %v1230 = vmax.f32 %v1228, 0.0
    %v1231 = vld [vmem:[%s8] sm:$0xff]
    %v1232 = vld [vmem:[%s8 + $0x8] sm:$0xff]
    %vm1233 = vcmask 130048
    %v1235 = vsel %vm1233, %v1147, 0
    %v1238 = vsel %vm1233, %v1148, 0
    %1240 = vmatprep.subr.mxu0 0.0
    %1241 = vmatpush1.msra.mxu0 %v1231
    %1242 = vmatprep.subr.mxu0 0.0
    %1243 = vmatpush1.msra.mxu0 %v1232
    %1244 = vmatprep.subr.mxu0 0.0
    %1245 = vmatpush1.msra.mxu0 0.0
    %1246 = vmatprep.subr.mxu0 0.0
    %1247 = vmatpush1.msra.mxu0 0.0
    %1248 = vmatprep.subr.mxu0 0.0
    %1249 = vmatpush1.msra.mxu0 0.0
    %1250 = vmatprep.subr.mxu0 0.0
    %1251 = vmatpush1.msra.mxu0 0.0
    %1252 = vmatprep.subr.mxu0 0.0
    %1253 = vmatpush1.msra.mxu0 0.0
    %1254 = vmatprep.subr.mxu0 0.0
    %1255 = vmatpush1.msra.mxu0 0.0
    %1256 = vmatprep.subr.mxu0 0.0
    %1257 = vmatpush1.msra.mxu0 0.0
    %1258 = vmatprep.subr.mxu0 0.0
    %1259 = vmatpush1.msra.mxu0 0.0
    %1260 = vmatprep.subr.mxu0 0.0
    %1261 = vmatpush1.msra.mxu0 0.0
    %1262 = vmatprep.subr.mxu0 0.0
    %1263 = vmatpush1.msra.mxu0 0.0
    %1264 = vmatprep.subr.mxu0 0.0
    %1265 = vmatpush1.msra.mxu0 0.0
    %1266 = vmatprep.subr.mxu0 0.0
    %1267 = vmatpush1.msra.mxu0 0.0
    %1268 = vmatprep.subr.mxu0 0.0
    %1269 = vmatpush1.msra.mxu0 0.0
    %1270 = vmatprep.subr.mxu0 0.0
    %1271 = vmatpush1.msra.mxu0 0.0
    %1272 = vmatprep.subr.mxu0 0.0
    %1273 = vmatpush1.msra.mxu0 0.0
    %1274 = vmatprep.subr.mxu0 0.0
    %1275 = vmatpush1.msra.mxu0 0.0
    %1276 = vmatprep.subr.mxu0 0.0
    %1277 = vmatpush1.msra.mxu0 0.0
    %1278 = vmatprep.subr.mxu0 0.0
    %1279 = vmatpush1.msra.mxu0 0.0
    %1280 = vmatprep.subr.mxu0 0.0
    %1281 = vmatpush1.msra.mxu0 0.0
    %1282 = vmatprep.subr.mxu0 0.0
    %1283 = vmatpush1.msra.mxu0 0.0
    %1284 = vmatprep.subr.mxu0 0.0
    %1285 = vmatpush1.msra.mxu0 0.0
    %1286 = vmatprep.subr.mxu0 0.0
    %1287 = vmatpush1.msra.mxu0 0.0
    %1288 = vmatprep.subr.mxu0 0.0
    %1289 = vmatpush1.msra.mxu0 0.0
    %1290 = vmatprep.subr.mxu0 0.0
    %1291 = vmatpush1.msra.mxu0 0.0
    %1292 = vmatprep.subr.mxu0 0.0
    %1293 = vmatpush1.msra.mxu0 0.0
    %1294 = vmatprep.subr.mxu0 0.0
    %1295 = vmatpush1.msra.mxu0 0.0
    %1296 = vmatprep.subr.mxu0 0.0
    %1297 = vmatpush1.msra.mxu0 0.0
    %1298 = vmatprep.subr.mxu0 0.0
    %1299 = vmatpush1.msra.mxu0 0.0
    %1300 = vmatprep.subr.mxu0 0.0
    %1301 = vmatpush1.msra.mxu0 0.0
    %1302 = vmatprep.subr.mxu0 0.0
    %1303 = vmatpush1.msra.mxu0 0.0
    %1304 = vmatprep.mubr.f32.mxu0 0.0
    %1305 = vmatmul.mubr.f32.gmra.mrb[0].mxu0 %v1235
    %v1306 = vpop.f32.mrb[0].mxu0
    %v1307 = vadd.f32 0.0, %v1306
    %v1308 = vpop.f32.mrb[0].mxu0
    %1309 = vmatprep.mubr.f32.mxu0 0.0
    %1310 = vmatmul.mubr.f32.gmra.mrb[0].mxu0 %v1238
    %v1311 = vpop.f32.mrb[0].mxu0
    %v1312 = vadd.f32 0.0, %v1311
    %v1313 = vpop.f32.mrb[0].mxu0
    %1314 = vdwg.mxu0
    %v1315 = vadd.f32 %v1229, %v1307
    %v1316 = vadd.f32 %v1230, %v1312
    %v1317 = vld [vmem:[%s9] sm:$0xff]
    %v1318 = vld [vmem:[%s9 + $0x8] sm:$0xff]
    %v1319 = vld [vmem:[%s9 + $0x10] sm:$0xff]
    %v1320 = vld [vmem:[%s9 + $0x18] sm:$0xff]
    %v1321 = vld [vmem:[%s9 + $0x20] sm:$0xff]
    %v1322 = vld [vmem:[%s9 + $0x28] sm:$0xff]
    %v1323 = vld [vmem:[%s9 + $0x30] sm:$0xff]
    %v1324 = vld [vmem:[%s9 + $0x38] sm:$0xff]
    %v1325 = vld [vmem:[%s9 + $0x40] sm:$0xff]
    %v1326 = vld [vmem:[%s9 + $0x48] sm:$0xff]
    %v1327 = vld [vmem:[%s9 + $0x50] sm:$0xff]
    %v1328 = vld [vmem:[%s9 + $0x58] sm:$0xff]
    %v1329 = vld [vmem:[%s9 + $0x60] sm:$0xff]
    %v1330 = vld [vmem:[%s9 + $0x68] sm:$0xff]
    %v1331 = vld [vmem:[%s9 + $0x70] sm:$0xff]
    %v1332 = vld [vmem:[%s9 + $0x78] sm:$0xff]
    %v1334 = vsel %vm796, %v1315, 0
    %v1337 = vsel %vm796, %v1316, 0
    %1339 = vmatprep.subr.mxu0 %v1318
    %1340 = vmatpush1.msra.mxu0 %v1317
    %1341 = vmatprep.subr.mxu0 %v1320
    %1342 = vmatpush1.msra.mxu0 %v1319
    %1343 = vmatprep.subr.mxu0 %v1322
    %1344 = vmatpush1.msra.mxu0 %v1321
    %1345 = vmatprep.subr.mxu0 %v1324
    %1346 = vmatpush1.msra.mxu0 %v1323
    %1347 = vmatprep.subr.mxu0 %v1326
    %1348 = vmatpush1.msra.mxu0 %v1325
    %1349 = vmatprep.subr.mxu0 %v1328
    %1350 = vmatpush1.msra.mxu0 %v1327
    %1351 = vmatprep.subr.mxu0 %v1330
    %1352 = vmatpush1.msra.mxu0 %v1329
    %1353 = vmatprep.subr.mxu0 %v1332
    %1354 = vmatpush1.msra.mxu0 %v1331
    %1355 = vmatprep.subr.mxu0 0.0
    %1356 = vmatpush1.msra.mxu0 0.0
    %1357 = vmatprep.subr.mxu0 0.0
    %1358 = vmatpush1.msra.mxu0 0.0
    %1359 = vmatprep.subr.mxu0 0.0
    %1360 = vmatpush1.msra.mxu0 0.0
    %1361 = vmatprep.subr.mxu0 0.0
    %1362 = vmatpush1.msra.mxu0 0.0
    %1363 = vmatprep.subr.mxu0 0.0
    %1364 = vmatpush1.msra.mxu0 0.0
    %1365 = vmatprep.subr.mxu0 0.0
    %1366 = vmatpush1.msra.mxu0 0.0
    %1367 = vmatprep.subr.mxu0 0.0
    %1368 = vmatpush1.msra.mxu0 0.0
    %1369 = vmatprep.subr.mxu0 0.0
    %1370 = vmatpush1.msra.mxu0 0.0
    %1371 = vmatprep.subr.mxu0 0.0
    %1372 = vmatpush1.msra.mxu0 0.0
    %1373 = vmatprep.subr.mxu0 0.0
    %1374 = vmatpush1.msra.mxu0 0.0
    %1375 = vmatprep.subr.mxu0 0.0
    %1376 = vmatpush1.msra.mxu0 0.0
    %1377 = vmatprep.subr.mxu0 0.0
    %1378 = vmatpush1.msra.mxu0 0.0
    %1379 = vmatprep.subr.mxu0 0.0
    %1380 = vmatpush1.msra.mxu0 0.0
    %1381 = vmatprep.subr.mxu0 0.0
    %1382 = vmatpush1.msra.mxu0 0.0
    %1383 = vmatprep.subr.mxu0 0.0
    %1384 = vmatpush1.msra.mxu0 0.0
    %1385 = vmatprep.subr.mxu0 0.0
    %1386 = vmatpush1.msra.mxu0 0.0
    %1387 = vmatprep.subr.mxu0 0.0
    %1388 = vmatpush1.msra.mxu0 0.0
    %1389 = vmatprep.subr.mxu0 0.0
    %1390 = vmatpush1.msra.mxu0 0.0
    %1391 = vmatprep.subr.mxu0 0.0
    %1392 = vmatpush1.msra.mxu0 0.0
    %1393 = vmatprep.subr.mxu0 0.0
    %1394 = vmatpush1.msra.mxu0 0.0
    %1395 = vmatprep.subr.mxu0 0.0
    %1396 = vmatpush1.msra.mxu0 0.0
    %1397 = vmatprep.subr.mxu0 0.0
    %1398 = vmatpush1.msra.mxu0 0.0
    %1399 = vmatprep.subr.mxu0 0.0
    %1400 = vmatpush1.msra.mxu0 0.0
    %1401 = vmatprep.subr.mxu0 0.0
    %1402 = vmatpush1.msra.mxu0 0.0
    %1403 = vmatprep.mubr.f32.mxu0 0.0
    %1404 = vmatmul.mubr.f32.gmra.mrb[0].mxu0 %v1334
    %v1405 = vpop.f32.mrb[0].mxu0
    %v1406 = vadd.f32 0.0, %v1405
    %v1407 = vpop.f32.mrb[0].mxu0
    %v1408 = vadd.f32 0.0, %v1407
    %1409 = vmatprep.mubr.f32.mxu0 0.0
    %1410 = vmatmul.mubr.f32.gmra.mrb[0].mxu0 %v1337
    %v1411 = vpop.f32.mrb[0].mxu0
    %v1412 = vadd.f32 0.0, %v1411
    %v1413 = vpop.f32.mrb[0].mxu0
    %v1414 = vadd.f32 0.0, %v1413
    %1415 = vdwg.mxu0
    %v1416 = vld [vmem:[%s10 + $0x24] sm:$0xff]
    %v1417 = vld [vmem:[%s10 + $0x2c] sm:$0xf]
    %v1418 = vld [vmem:[%s11 + $0x24] sm:$0xff]
    %v1419 = vld [vmem:[%s11 + $0x2c] sm:$0xf]
    %1421 = vset.pattern.permute.xlu0 0
    %1422 = vperm.xlu0 %1421, %v1416
    %v1423 = vpop.permute.xlu0 %1422
    %1426 = vset.pattern.permute.xlu0 0
    %1427 = vperm.xlu0 %1426, %v1417
    %v1428 = vpop.permute.xlu0 %1427
    %v1430 = vmul.f32 %v1423, %v69
    %v1431 = vmul.f32 %v1423, %v70
    %v1432 = vmul.f32 %v1428, %v77
    %v1433 = vmul.f32 %v1428, %v78
    %1434 = vset.pattern.permute.xlu0 1
    %1435 = vperm.xlu0 %1434, %v1416
    %v1436 = vpop.permute.xlu0 %1435
    %1438 = vset.pattern.permute.xlu0 1
    %1439 = vperm.xlu0 %1438, %v1417
    %v1440 = vpop.permute.xlu0 %1439
    %v1442 = vmul.f32 %v1436, %v71
    %v1443 = vmul.f32 %v1436, %v72
    %v1444 = vmul.f32 %v1440, %v79
    %v1445 = vmul.f32 %v1440, %v80
    %v1446 = vadd.f32 %v1430, %v1442
    %v1447 = vadd.f32 %v1431, %v1443
    %v1448 = vadd.f32 %v1432, %v1444
    %v1449 = vadd.f32 %v1433, %v1445
    %1450 = vset.pattern.permute.xlu0 2
    %1451 = vperm.xlu0 %1450, %v1416
    %v1452 = vpop.permute.xlu0 %1451
    %1454 = vset.pattern.permute.xlu0 2
    %1455 = vperm.xlu0 %1454, %v1417
    %v1456 = vpop.permute.xlu0 %1455
    %v1458 = vmul.f32 %v1452, %v73
    %v1459 = vmul.f32 %v1452, %v74
    %v1460 = vmul.f32 %v1456, %v81
    %v1461 = vmul.f32 %v1456, %v82
    %v1462 = vadd.f32 %v1446, %v1458
    %v1463 = vadd.f32 %v1447, %v1459
    %v1464 = vadd.f32 %v1448, %v1460
    %v1465 = vadd.f32 %v1449, %v1461
    %1466 = vset.pattern.permute.xlu0 3
    %1467 = vperm.xlu0 %1466, %v1416
    %v1468 = vpop.permute.xlu0 %1467
    %1470 = vset.pattern.permute.xlu0 3
    %1471 = vperm.xlu0 %1470, %v1417
    %v1472 = vpop.permute.xlu0 %1471
    %v1474 = vmul.f32 %v1468, %v75
    %v1475 = vmul.f32 %v1468, %v76
    %v1476 = vmul.f32 %v1472, %v83
    %v1477 = vmul.f32 %v1472, %v84
    %v1478 = vadd.f32 %v1462, %v1474
    %v1479 = vadd.f32 %v1463, %v1475
    %v1480 = vadd.f32 %v1464, %v1476
    %v1481 = vadd.f32 %v1465, %v1477
    %1483 = vset.pattern.permute.xlu0 0
    %1484 = vperm.xlu0 %1483, %v1418
    %v1485 = vpop.permute.xlu0 %1484
    %1488 = vset.pattern.permute.xlu0 0
    %1489 = vperm.xlu0 %1488, %v1419
    %v1490 = vpop.permute.xlu0 %1489
    %v1492 = vadd.f32 %v1478, %v1485
    %v1493 = vadd.f32 %v1479, %v1485
    %v1494 = vadd.f32 %v1480, %v1490
    %v1495 = vadd.f32 %v1481, %v1490
    %v1496 = vmax.f32 %v1492, 0.0
    %v1497 = vmax.f32 %v1493, 0.0
    %v1498 = vmax.f32 %v1494, 0.0
    %v1499 = vmax.f32 %v1495, 0.0
    %v1500 = vld [vmem:[%s10 + $0x30] sm:$0xff]
    %v1501 = vld [vmem:[%s10 + $0x38] sm:$0xf]
    %v1502 = vld [vmem:[%s11 + $0x30] sm:$0xff]
    %v1503 = vld [vmem:[%s11 + $0x38] sm:$0xf]
    %v1504 = vadd.f32 %v69, %v70
    %1505 = vadd.xlane.f32.xlu0 %v1504
    %v1506 = vpop.xlane.xlu0 %1505
    %v1507 = vsel %vm1068, %v77, 0.0
    %v1508 = vsel %vm1068, %v78, 0.0
    %v1509 = vadd.f32 %v1507, %v1508
    %1510 = vadd.xlane.f32.xlu0 %v1509
    %v1511 = vpop.xlane.xlu0 %1510
    %v1512 = vrcp.pop 256.0
    %v1513 = vmul.f32 %v1506, %v1512
    %v1514 = vmul.f32 %v1511, %v1512
    %v1515 = vmul.f32 %v1500, %v1513
    %v1516 = vmul.f32 %v1501, %v1514
    %v1517 = vadd.f32 %v71, %v72
    %1518 = vadd.xlane.f32.xlu0 %v1517
    %v1519 = vpop.xlane.xlu0 %1518
    %v1520 = vsel %vm1068, %v79, 0.0
    %v1521 = vsel %vm1068, %v80, 0.0
    %v1522 = vadd.f32 %v1520, %v1521
    %1523 = vadd.xlane.f32.xlu0 %v1522
    %v1524 = vpop.xlane.xlu0 %1523
    %v1525 = vmul.f32 %v1519, %v1512
    %v1526 = vmul.f32 %v1524, %v1512
    %v1527 = vmul.f32 %v1500, %v1525
    %v1528 = vmul.f32 %v1501, %v1526
    %1531 = vrot.lane.b32.xlu0 %v1527, 127
    %v1532 = vpop.permute.xlu0 %1531
    %1533 = vrot.lane.b32.xlu0 %v1528, 127
    %v1534 = vpop.permute.xlu0 %1533
    %v1537 = vadd.f32 %v1515, %v1532
    %v1538 = vadd.f32 %v1516, %v1534
    %v1539 = vadd.f32 %v73, %v74
    %1540 = vadd.xlane.f32.xlu0 %v1539
    %v1541 = vpop.xlane.xlu0 %1540
    %v1542 = vsel %vm1068, %v81, 0.0
    %v1543 = vsel %vm1068, %v82, 0.0
    %v1544 = vadd.f32 %v1542, %v1543
    %1545 = vadd.xlane.f32.xlu0 %v1544
    %v1546 = vpop.xlane.xlu0 %1545
    %v1547 = vmul.f32 %v1541, %v1512
    %v1548 = vmul.f32 %v1546, %v1512
    %v1549 = vmul.f32 %v1500, %v1547
    %v1550 = vmul.f32 %v1501, %v1548
    %1553 = vrot.lane.b32.xlu0 %v1549, 126
    %v1554 = vpop.permute.xlu0 %1553
    %1555 = vrot.lane.b32.xlu0 %v1550, 126
    %v1556 = vpop.permute.xlu0 %1555
    %v1559 = vadd.f32 %v1537, %v1554
    %v1560 = vadd.f32 %v1538, %v1556
    %v1561 = vadd.f32 %v75, %v76
    %1562 = vadd.xlane.f32.xlu0 %v1561
    %v1563 = vpop.xlane.xlu0 %1562
    %v1564 = vsel %vm1068, %v83, 0.0
    %v1565 = vsel %vm1068, %v84, 0.0
    %v1566 = vadd.f32 %v1564, %v1565
    %1567 = vadd.xlane.f32.xlu0 %v1566
    %v1568 = vpop.xlane.xlu0 %1567
    %v1569 = vmul.f32 %v1563, %v1512
    %v1570 = vmul.f32 %v1568, %v1512
    %v1571 = vmul.f32 %v1500, %v1569
    %v1572 = vmul.f32 %v1501, %v1570
    %1575 = vrot.lane.b32.xlu0 %v1571, 125
    %v1576 = vpop.permute.xlu0 %1575
    %1577 = vrot.lane.b32.xlu0 %v1572, 125
    %v1578 = vpop.permute.xlu0 %1577
    %v1581 = vadd.f32 %v1559, %v1576
    %v1582 = vadd.f32 %v1560, %v1578
    %v1583 = vadd.f32 %v1581, %v1502
    %v1584 = vadd.f32 %v1582, %v1503
    %v1585 = vmax.f32 %v1583, 0.0
    %v1586 = vmax.f32 %v1584, 0.0
    %v1587 = vmul.f32 %v1496, %v1406
    %v1588 = vmul.f32 %v1497, %v1408
    %v1589 = vmul.f32 %v1498, %v1412
    %v1590 = vmul.f32 %v1499, %v1414
    %1592 = vset.pattern.permute.xlu0 0
    %1593 = vperm.xlu0 %1592, %v1585
    %v1594 = vpop.permute.xlu0 %1593
    %1597 = vset.pattern.permute.xlu0 0
    %1598 = vperm.xlu0 %1597, %v1586
    %v1599 = vpop.permute.xlu0 %1598
    %v1601 = vadd.f32 %v1587, %v1594
    %v1602 = vadd.f32 %v1588, %v1594
    %v1603 = vadd.f32 %v1589, %v1599
    %v1604 = vadd.f32 %v1590, %v1599
    %1605 = vst [vmem:[%s12] sm:$0xff] %v1601
    %1606 = vst [vmem:[%s12 + $0x8] sm:$0xff] %v1602
    %1607 = vst [vmem:[%s12 + $0x10] sm:$0xf] %v1603
    %1608 = vst [vmem:[%s12 + $0x18] sm:$0xf] %v1604
    // Predicated region
    $region58: #{forward.1} parent=1 // pred_check
      _
    $region59: #{forward.1} parent=1 // pred_check_branch
      %1610 = sbr.rel (0) target = $region61
    $region60: #{forward.1} parent=1 // pred_region
      _
    $region61: #{forward.1} parent=1 // pred_fallthru
      _
    // Predicated region
    $region62: #{forward.1} parent=1 // pred_check
      _
    $region63: #{forward.1} parent=1 // pred_check_branch
      %1612 = sbr.rel (0) target = $region65
    $region64: #{forward.1} parent=1 // pred_region
      _
    $region65: #{forward.1} parent=1 // pred_fallthru
      _
    %1613 = vsyncpa [#allocation3], 1
    %1614 = vsyncpa [#allocation5], 1

</llo_original>
